<compile_context>
chip_gen: v7x
topology: tpu7x:2x2x1
jax: 0.10.0
libtpu: 0.0.40
codegen_flags: <defaults>
</compile_context>

<pallas_src>
import functools

import jax
import jax.numpy as jnp
from jax.experimental import pallas as pl
from jax.experimental.pallas import tpu as pltpu


# ----------------------------- fused detection kernel ------------------------------------

def _hard_detection_kernel(x_ref, det_ref, pad_ref, *, edge_threshold):
    # x_ref:   (H, W, C)       unpadded NHWC features (batch dim squeezed away)
    # det_ref: (H*W, C) int8   detection mask (0/1), lane-dense flattened rows
    # pad_ref: (H+2, W+2, C)   VMEM scratch used as the in-kernel halo buffer
    H, W, C = x_ref.shape

    x = x_ref[...]

    # ---- build the zero-padded block in VMEM (replaces the host-side jnp.pad) ----
    pad_ref[0:1, :, :] = jnp.zeros((1, W + 2, C), jnp.float32)
    pad_ref[H + 1:H + 2, :, :] = jnp.zeros((1, W + 2, C), jnp.float32)
    pad_ref[:, 0:1, :] = jnp.zeros((H + 2, 1, C), jnp.float32)
    pad_ref[:, W + 1:W + 2, :] = jnp.zeros((H + 2, 1, C), jnp.float32)
    pad_ref[1:H + 1, 1:W + 1, :] = x

    def sl(a, b):  # 3x3 stencil tap: shifted (H, W, C) view of the zero-padded block
        return pad_ref[a:a + H, b:b + W, :]

    # handcrafted second-derivative filters (exact 3x3 stencils of the PyTorch module;
    # conv2d == cross-correlation with zero padding)
    center = sl(1, 1)
    dii = sl(0, 1) - 2.0 * center + sl(2, 1)
    djj = sl(1, 0) - 2.0 * center + sl(1, 2)
    dij = 0.25 * (sl(0, 0) - sl(0, 2) - sl(2, 0) + sl(2, 2))
    det = dii * djj - dij * dij
    tr = dii + djj

    # edge test: torch.min(tr*tr/det <= thr, det > 0)  <=>  (tr*tr <= thr*det) & (det > 0)
    # (identical whenever det > 0, which is the only case that matters); division-free,
    # never produces inf/NaN.
    thr = (edge_threshold + 1.0) ** 2 / edge_threshold
    is_not_edge = jnp.logical_and(tr * tr <= thr * det, det > 0.0)

    # depth-wise (channel) maximum — lane-dim reduce
    dw_max = jnp.max(x, axis=-1, keepdims=True)
    is_dw_max = x == dw_max

    # ---- 3x3 local max, stride 1, padding 1 (F.max_pool2d pads with -inf) ----
    # Re-use the same scratch: overwrite just the 1-wide border ring with -inf.
    pad_ref[0:1, :, :] = jnp.full((1, W + 2, C), -jnp.inf, jnp.float32)
    pad_ref[H + 1:H + 2, :, :] = jnp.full((1, W + 2, C), -jnp.inf, jnp.float32)
    pad_ref[:, 0:1, :] = jnp.full((H + 2, 1, C), -jnp.inf, jnp.float32)
    pad_ref[:, W + 1:W + 2, :] = jnp.full((H + 2, 1, C), -jnp.inf, jnp.float32)

    # separable max: vertical (3 taps) then horizontal (3 taps)
    vmax = jnp.maximum(jnp.maximum(pad_ref[0:H, :, :], pad_ref[1:H + 1, :, :]),
                       pad_ref[2:H + 2, :, :])
    lmax = jnp.maximum(jnp.maximum(vmax[:, 0:W, :], vmax[:, 1:W + 1, :]),
                       vmax[:, 2:W + 2, :])
    is_local_max = x == lmax

    detected = jnp.logical_and(is_dw_max, jnp.logical_and(is_local_max, is_not_edge))
    # store 0/1 directly as int8 (4x less output HBM traffic than f32); the (H,W)->(H*W)
    # fold is layout-preserving (W is a multiple of 8), making the stores unmasked.
    det_ref[...] = detected.reshape(H * W, C).astype(jnp.int8)


def hard_detection_module(batch_nchw, edge_threshold=5.0):
    """PyTorch HardDetectionModule.forward: (B, C, H, W) -> bool (B, C, H, W)."""
    B, C, H, W = batch_nchw.shape
    # NCHW -> NHWC so channels sit on the lane dimension (lane-dense stencil + stores).
    # (If the upstream producer can emit NHWC directly, this transpose disappears.)
    x = jnp.transpose(batch_nchw, (0, 2, 3, 1)).astype(jnp.float32)

    flops_per_elem = 30  # 3x3 stencils + det/tr + edge test + channel/local max + ANDs
    det_i8 = pl.pallas_call(
        functools.partial(_hard_detection_kernel, edge_threshold=float(edge_threshold)),
        out_shape=jax.ShapeDtypeStruct((B, H * W, C), jnp.int8),
        grid_spec=pltpu.PrefetchScalarGridSpec(
            num_scalar_prefetch=0,
            grid=(B,),
            in_specs=[pl.BlockSpec((None, H, W, C), lambda b: (b, 0, 0, 0))],
            out_specs=pl.BlockSpec((None, H * W, C), lambda b: (b, 0, 0)),
            scratch_shapes=[pltpu.VMEM((H + 2, W + 2, C), jnp.float32)],
        ),
        compiler_params=pltpu.CompilerParams(dimension_semantics=("parallel",)),
        cost_estimate=pl.CostEstimate(
            flops=flops_per_elem * B * H * W * C,
            transcendentals=0,
            bytes_accessed=B * H * W * C * 4 + B * H * W * C * 1,
        ),
    )(x)

    # back to NCHW bool; the transpose + cast now run on 1-byte data.
    det = det_i8.reshape(B, H, W, C)
    return jnp.transpose(det, (0, 3, 1, 2)).astype(jnp.bool_)


# ----------------------------- pure-JAX reference (mirrors the PyTorch code) -------------

def hard_detection_reference(batch_nchw, edge_threshold=5.0):
    b, c, h, w = batch_nchw.shape
    x = batch_nchw.astype(jnp.float32)

    dw_max = jnp.max(x, axis=1, keepdims=True)
    is_dw_max = x == dw_max

    pn = jnp.pad(x, ((0, 0), (0, 0), (1, 1), (1, 1)), constant_values=-jnp.inf)
    local_max = pn[:, :, 0:h, 0:w]
    for a in range(3):
        for bb in range(3):
            local_max = jnp.maximum(local_max, pn[:, :, a:a + h, bb:bb + w])
    is_local_max = x == local_max

    p0 = jnp.pad(x, ((0, 0), (0, 0), (1, 1), (1, 1)))

    def sl(a, bb):
        return p0[:, :, a:a + h, bb:bb + w]

    dii = sl(0, 1) - 2.0 * sl(1, 1) + sl(2, 1)
    djj = sl(1, 0) - 2.0 * sl(1, 1) + sl(1, 2)
    dij = 0.25 * (sl(0, 0) - sl(0, 2) - sl(2, 0) + sl(2, 2))
    det = dii * djj - dij * dij
    tr = dii + djj
    thr = (edge_threshold + 1.0) ** 2 / edge_threshold
    is_not_edge = jnp.logical_and(tr * tr / det <= thr, det > 0)
    return jnp.logical_and(is_dw_max, jnp.logical_and(is_local_max, is_not_edge))


# ----------------------------- demo ------------------------------------------------------

if __name__ == "__main__":
    key = jax.random.PRNGKey(0)
    # Dense feature maps (C large, small spatial extent, as in D2Net). C=128 keeps the
    # example small while filling a full 128-lane vreg.
    batch = jax.random.normal(key, (2, 128, 16, 16), jnp.float32)

    fwd = jax.jit(hard_detection_module)
    out = jax.block_until_ready(fwd(batch))

    assert out.shape == (2, 128, 16, 16)
    assert out.dtype == jnp.bool_

    ref = hard_detection_reference(batch)
    assert bool(jnp.array_equal(out, ref)), "Pallas kernel disagrees with JAX reference"

    print("KERNEL_OK")
</pallas_src>

<mosaic_0001>
module attributes {stable_mosaic.version = 11 : i64} {
  func.func @_hard_detection_kernel(%arg0: i32, %arg1: memref<1x16x16x128xf32, #tpu.memory_space<vmem>>, %arg2: memref<1x256x128xi8, #tpu.memory_space<vmem>>, %arg3: memref<18x18x128xf32, #tpu.memory_space<vmem>>) attributes {dimension_semantics = [#tpu.dimension_semantics<parallel>], iteration_bounds = array<i64: 2>, scalar_prefetch = 0 : i64, scratch_operands = 1 : i64, tpu.core_type = #tpu.core_type<tc>, window_params = [{transform_indices = @transform_0, window_bounds = array<i64: 1, 16, 16, 128>}, {transform_indices = @transform_1, window_bounds = array<i64: 1, 256, 128>}]} {
    %c0 = arith.constant 0 : index
    %c0_0 = arith.constant 0 : index
    %c0_1 = arith.constant 0 : index
    %c0_2 = arith.constant 0 : index
    %0 = vector.load %arg1[%c0, %c0_0, %c0_1, %c0_2] : memref<1x16x16x128xf32, #tpu.memory_space<vmem>>, vector<1x16x16x128xf32>
    %1 = vector.shape_cast %0 : vector<1x16x16x128xf32> to vector<16x16x128xf32>
    %cst = arith.constant 0.000000e+00 : f32
    %2 = vector.broadcast %cst : f32 to vector<1x18x128xf32>
    %c0_3 = arith.constant 0 : index
    %c0_4 = arith.constant 0 : index
    %c0_5 = arith.constant 0 : index
    %3 = vector.load %arg3[%c0_3, %c0_4, %c0_5] : memref<18x18x128xf32, #tpu.memory_space<vmem>>, vector<1x18x128xf32>
    tpu.vector_store %arg3[%c0_3, %c0_4, %c0_5], %2 {strides = array<i32>} : memref<18x18x128xf32, #tpu.memory_space<vmem>>, vector<1x18x128xf32>,
    %cst_6 = arith.constant 0.000000e+00 : f32
    %4 = vector.broadcast %cst_6 : f32 to vector<1x18x128xf32>
    %c17 = arith.constant 17 : index
    %c0_7 = arith.constant 0 : index
    %c0_8 = arith.constant 0 : index
    %5 = vector.load %arg3[%c17, %c0_7, %c0_8] : memref<18x18x128xf32, #tpu.memory_space<vmem>>, vector<1x18x128xf32>
    tpu.vector_store %arg3[%c17, %c0_7, %c0_8], %4 {strides = array<i32>} : memref<18x18x128xf32, #tpu.memory_space<vmem>>, vector<1x18x128xf32>,
    %cst_9 = arith.constant 0.000000e+00 : f32
    %6 = vector.broadcast %cst_9 : f32 to vector<18x1x128xf32>
    %c0_10 = arith.constant 0 : index
    %c0_11 = arith.constant 0 : index
    %c0_12 = arith.constant 0 : index
    %7 = vector.load %arg3[%c0_10, %c0_11, %c0_12] : memref<18x18x128xf32, #tpu.memory_space<vmem>>, vector<18x1x128xf32>
    tpu.vector_store %arg3[%c0_10, %c0_11, %c0_12], %6 {strides = array<i32>} : memref<18x18x128xf32, #tpu.memory_space<vmem>>, vector<18x1x128xf32>,
    %cst_13 = arith.constant 0.000000e+00 : f32
    %8 = vector.broadcast %cst_13 : f32 to vector<18x1x128xf32>
    %c0_14 = arith.constant 0 : index
    %c17_15 = arith.constant 17 : index
    %c0_16 = arith.constant 0 : index
    %9 = vector.load %arg3[%c0_14, %c17_15, %c0_16] : memref<18x18x128xf32, #tpu.memory_space<vmem>>, vector<18x1x128xf32>
    tpu.vector_store %arg3[%c0_14, %c17_15, %c0_16], %8 {strides = array<i32>} : memref<18x18x128xf32, #tpu.memory_space<vmem>>, vector<18x1x128xf32>,
    %c1 = arith.constant 1 : index
    %c1_17 = arith.constant 1 : index
    %c0_18 = arith.constant 0 : index
    %10 = vector.load %arg3[%c1, %c1_17, %c0_18] : memref<18x18x128xf32, #tpu.memory_space<vmem>>, vector<16x16x128xf32>
    tpu.vector_store %arg3[%c1, %c1_17, %c0_18], %1 {strides = array<i32>} : memref<18x18x128xf32, #tpu.memory_space<vmem>>, vector<16x16x128xf32>,
    %c1_19 = arith.constant 1 : index
    %c1_20 = arith.constant 1 : index
    %c0_21 = arith.constant 0 : index
    %11 = vector.load %arg3[%c1_19, %c1_20, %c0_21] : memref<18x18x128xf32, #tpu.memory_space<vmem>>, vector<16x16x128xf32>
    %c0_22 = arith.constant 0 : index
    %c1_23 = arith.constant 1 : index
    %c0_24 = arith.constant 0 : index
    %12 = vector.load %arg3[%c0_22, %c1_23, %c0_24] : memref<18x18x128xf32, #tpu.memory_space<vmem>>, vector<16x16x128xf32>
    %cst_25 = arith.constant 2.000000e+00 : f32
    %13 = vector.broadcast %cst_25 : f32 to vector<16x16x128xf32>
    %14 = arith.mulf %13, %11 : vector<16x16x128xf32>
    %15 = arith.subf %12, %14 : vector<16x16x128xf32>
    %c2 = arith.constant 2 : index
    %c1_26 = arith.constant 1 : index
    %c0_27 = arith.constant 0 : index
    %16 = vector.load %arg3[%c2, %c1_26, %c0_27] : memref<18x18x128xf32, #tpu.memory_space<vmem>>, vector<16x16x128xf32>
    %17 = arith.addf %15, %16 : vector<16x16x128xf32>
    %c1_28 = arith.constant 1 : index
    %c0_29 = arith.constant 0 : index
    %c0_30 = arith.constant 0 : index
    %18 = vector.load %arg3[%c1_28, %c0_29, %c0_30] : memref<18x18x128xf32, #tpu.memory_space<vmem>>, vector<16x16x128xf32>
    %cst_31 = arith.constant 2.000000e+00 : f32
    %19 = vector.broadcast %cst_31 : f32 to vector<16x16x128xf32>
    %20 = arith.mulf %19, %11 : vector<16x16x128xf32>
    %21 = arith.subf %18, %20 : vector<16x16x128xf32>
    %c1_32 = arith.constant 1 : index
    %c2_33 = arith.constant 2 : index
    %c0_34 = arith.constant 0 : index
    %22 = vector.load %arg3[%c1_32, %c2_33, %c0_34] : memref<18x18x128xf32, #tpu.memory_space<vmem>>, vector<16x16x128xf32>
    %23 = arith.addf %21, %22 : vector<16x16x128xf32>
    %c0_35 = arith.constant 0 : index
    %c0_36 = arith.constant 0 : index
    %c0_37 = arith.constant 0 : index
    %24 = vector.load %arg3[%c0_35, %c0_36, %c0_37] : memref<18x18x128xf32, #tpu.memory_space<vmem>>, vector<16x16x128xf32>
    %c0_38 = arith.constant 0 : index
    %c2_39 = arith.constant 2 : index
    %c0_40 = arith.constant 0 : index
    %25 = vector.load %arg3[%c0_38, %c2_39, %c0_40] : memref<18x18x128xf32, #tpu.memory_space<vmem>>, vector<16x16x128xf32>
    %26 = arith.subf %24, %25 : vector<16x16x128xf32>
    %c2_41 = arith.constant 2 : index
    %c0_42 = arith.constant 0 : index
    %c0_43 = arith.constant 0 : index
    %27 = vector.load %arg3[%c2_41, %c0_42, %c0_43] : memref<18x18x128xf32, #tpu.memory_space<vmem>>, vector<16x16x128xf32>
    %28 = arith.subf %26, %27 : vector<16x16x128xf32>
    %c2_44 = arith.constant 2 : index
    %c2_45 = arith.constant 2 : index
    %c0_46 = arith.constant 0 : index
    %29 = vector.load %arg3[%c2_44, %c2_45, %c0_46] : memref<18x18x128xf32, #tpu.memory_space<vmem>>, vector<16x16x128xf32>
    %30 = arith.addf %28, %29 : vector<16x16x128xf32>
    %cst_47 = arith.constant 2.500000e-01 : f32
    %31 = vector.broadcast %cst_47 : f32 to vector<16x16x128xf32>
    %32 = arith.mulf %31, %30 : vector<16x16x128xf32>
    %33 = arith.mulf %17, %23 : vector<16x16x128xf32>
    %34 = arith.mulf %32, %32 : vector<16x16x128xf32>
    %35 = arith.subf %33, %34 : vector<16x16x128xf32>
    %36 = arith.addf %17, %23 : vector<16x16x128xf32>
    %37 = arith.mulf %36, %36 : vector<16x16x128xf32>
    %cst_48 = arith.constant 7.1999998 : f32
    %38 = vector.broadcast %cst_48 : f32 to vector<16x16x128xf32>
    %39 = arith.mulf %38, %35 : vector<16x16x128xf32>
    %40 = arith.cmpf ole, %37, %39 : vector<16x16x128xf32>
    %cst_49 = arith.constant 0.000000e+00 : f32
    %41 = vector.broadcast %cst_49 : f32 to vector<16x16x128xf32>
    %42 = arith.cmpf ogt, %35, %41 : vector<16x16x128xf32>
    %43 = arith.andi %40, %42 : vector<16x16x128xi1>
    %cst_50 = arith.constant dense<0xFF800000> : vector<16x16xf32>
    %44 = vector.multi_reduction <maximumf>, %1, %cst_50 [2] : vector<16x16x128xf32> to vector<16x16xf32>
    %45 = vector.shape_cast %44 : vector<16x16xf32> to vector<16x16x1xf32>
    %46 = vector.broadcast %45 : vector<16x16x1xf32> to vector<16x16x128xf32>
    %47 = arith.cmpf oeq, %1, %46 : vector<16x16x128xf32>
    %cst_51 = arith.constant 0xFF800000 : f32
    %48 = vector.broadcast %cst_51 : f32 to vector<1x18x128xf32>
    %c0_52 = arith.constant 0 : index
    %c0_53 = arith.constant 0 : index
    %c0_54 = arith.constant 0 : index
    %49 = vector.load %arg3[%c0_52, %c0_53, %c0_54] : memref<18x18x128xf32, #tpu.memory_space<vmem>>, vector<1x18x128xf32>
    tpu.vector_store %arg3[%c0_52, %c0_53, %c0_54], %48 {strides = array<i32>} : memref<18x18x128xf32, #tpu.memory_space<vmem>>, vector<1x18x128xf32>,
    %cst_55 = arith.constant 0xFF800000 : f32
    %50 = vector.broadcast %cst_55 : f32 to vector<1x18x128xf32>
    %c17_56 = arith.constant 17 : index
    %c0_57 = arith.constant 0 : index
    %c0_58 = arith.constant 0 : index
    %51 = vector.load %arg3[%c17_56, %c0_57, %c0_58] : memref<18x18x128xf32, #tpu.memory_space<vmem>>, vector<1x18x128xf32>
    tpu.vector_store %arg3[%c17_56, %c0_57, %c0_58], %50 {strides = array<i32>} : memref<18x18x128xf32, #tpu.memory_space<vmem>>, vector<1x18x128xf32>,
    %cst_59 = arith.constant 0xFF800000 : f32
    %52 = vector.broadcast %cst_59 : f32 to vector<18x1x128xf32>
    %c0_60 = arith.constant 0 : index
    %c0_61 = arith.constant 0 : index
    %c0_62 = arith.constant 0 : index
    %53 = vector.load %arg3[%c0_60, %c0_61, %c0_62] : memref<18x18x128xf32, #tpu.memory_space<vmem>>, vector<18x1x128xf32>
    tpu.vector_store %arg3[%c0_60, %c0_61, %c0_62], %52 {strides = array<i32>} : memref<18x18x128xf32, #tpu.memory_space<vmem>>, vector<18x1x128xf32>,
    %cst_63 = arith.constant 0xFF800000 : f32
    %54 = vector.broadcast %cst_63 : f32 to vector<18x1x128xf32>
    %c0_64 = arith.constant 0 : index
    %c17_65 = arith.constant 17 : index
    %c0_66 = arith.constant 0 : index
    %55 = vector.load %arg3[%c0_64, %c17_65, %c0_66] : memref<18x18x128xf32, #tpu.memory_space<vmem>>, vector<18x1x128xf32>
    tpu.vector_store %arg3[%c0_64, %c17_65, %c0_66], %54 {strides = array<i32>} : memref<18x18x128xf32, #tpu.memory_space<vmem>>, vector<18x1x128xf32>,
    %c0_67 = arith.constant 0 : index
    %c0_68 = arith.constant 0 : index
    %c0_69 = arith.constant 0 : index
    %56 = vector.load %arg3[%c0_67, %c0_68, %c0_69] : memref<18x18x128xf32, #tpu.memory_space<vmem>>, vector<16x18x128xf32>
    %c1_70 = arith.constant 1 : index
    %c0_71 = arith.constant 0 : index
    %c0_72 = arith.constant 0 : index
    %57 = vector.load %arg3[%c1_70, %c0_71, %c0_72] : memref<18x18x128xf32, #tpu.memory_space<vmem>>, vector<16x18x128xf32>
    %58 = arith.maximumf %56, %57 : vector<16x18x128xf32>
    %c2_73 = arith.constant 2 : index
    %c0_74 = arith.constant 0 : index
    %c0_75 = arith.constant 0 : index
    %59 = vector.load %arg3[%c2_73, %c0_74, %c0_75] : memref<18x18x128xf32, #tpu.memory_space<vmem>>, vector<16x18x128xf32>
    %60 = arith.maximumf %58, %59 : vector<16x18x128xf32>
    %61 = vector.extract_strided_slice %60 {offsets = [0, 0, 0], sizes = [16, 16, 128], strides = [1, 1, 1]} : vector<16x18x128xf32> to vector<16x16x128xf32>
    %62 = vector.extract_strided_slice %60 {offsets = [0, 1, 0], sizes = [16, 16, 128], strides = [1, 1, 1]} : vector<16x18x128xf32> to vector<16x16x128xf32>
    %63 = arith.maximumf %61, %62 : vector<16x16x128xf32>
    %64 = vector.extract_strided_slice %60 {offsets = [0, 2, 0], sizes = [16, 16, 128], strides = [1, 1, 1]} : vector<16x18x128xf32> to vector<16x16x128xf32>
    %65 = arith.maximumf %63, %64 : vector<16x16x128xf32>
    %66 = arith.cmpf oeq, %1, %65 : vector<16x16x128xf32>
    %67 = arith.andi %66, %43 : vector<16x16x128xi1>
    %68 = arith.andi %47, %67 : vector<16x16x128xi1>
    %69 = vector.shape_cast %68 : vector<16x16x128xi1> to vector<256x128xi1>
    %70 = arith.extui %69 : vector<256x128xi1> to vector<256x128xi8>
    %c0_76 = arith.constant 0 : index
    %c0_77 = arith.constant 0 : index
    %c0_78 = arith.constant 0 : index
    %71 = vector.load %arg2[%c0_76, %c0_77, %c0_78] : memref<1x256x128xi8, #tpu.memory_space<vmem>>, vector<1x256x128xi8>
    %72 = vector.shape_cast %71 : vector<1x256x128xi8> to vector<256x128xi8>
    %73 = vector.shape_cast %70 : vector<256x128xi8> to vector<1x256x128xi8>
    tpu.vector_store %arg2[%c0_76, %c0_77, %c0_78], %73 {strides = array<i32>} : memref<1x256x128xi8, #tpu.memory_space<vmem>>, vector<1x256x128xi8>,
    return
  }
  func.func @transform_0(%arg0: i32) -> (i32, i32, i32, i32) {
    %c0_i32 = arith.constant 0 : i32
    %c0_i32_0 = arith.constant 0 : i32
    %c0_i32_1 = arith.constant 0 : i32
    %c0_i32_2 = arith.constant 0 : i32
    return %arg0, %c0_i32, %c0_i32_0, %c0_i32_1 : i32, i32, i32, i32
  }
  func.func @transform_1(%arg0: i32) -> (i32, i32, i32) {
    %c0_i32 = arith.constant 0 : i32
    %c0_i32_0 = arith.constant 0 : i32
    %c0_i32_1 = arith.constant 0 : i32
    return %arg0, %c0_i32, %c0_i32_0 : i32, i32, i32
  }
}

</mosaic_0001>

<llo_original>
// kernel: hard_detection_module.1
$region0: #{hard_detection_module.1}
  #allocation0 [shape = 'u32[]', space=smem, size = 0x4, offset = 0x4, fixed_abs, tag = 'smem constant byte address 0x4 - core index']
  #allocation1 [shape = 'u32[144,128]{1,0:T(1,128)}', space=vmem, size = 0x12000, scoped, tag = 'internal scratch']
  #allocation2 [shape = 'f32[18,18,128]{2,1,0:T(8,128)}', space=vmem, size = 0x36000, scoped, tag = 'scratch operand']
  %s0 = inlined_call_operand.hbm [shape: f32[2,16,16,128], index: 0, kind: input, shape index: {}]
  %s1 = inlined_call_operand.vmem [shape: s8[2,256,128], index: 1, kind: output, shape index: {}]
  %s2 = sld [smem:[#allocation0]]
  $region41: #{hard_detection_module.1} parent=0
    _
  %s4 = ssub.s32 1, %s2
  %s5 = scalar_select 0, %s4, %s2
  $region1: #{hard_detection_module.1} parent=0
    #allocation3 [shape = 'u8[262144]{0}', space=vmem, size = 0x40000, scoped, tag = 'input window, operand 0']
    #allocation4 [shape = 's32[2]{0}', space=sflag, size = 0x8, scoped, tag = 'scoped memory for hard_detection_module.1']
    %6 = vsyncpa [#allocation4], 0
    %s7 = scalar_lea.sflag [#allocation4], 1
    %8 = vsyncpa %s7, 0
    loop: start=0, step=1, limit=4
    $region2: #{hard_detection_module.1} parent=1 // loop_pre_header
      _
    $region3: #{hard_detection_module.1} parent=1 // loop_header
      %s10 = sphi 0, %s14
      %p11 = scmp.ge.s32.totalorder %s10, 4
      %s20 = sphi 0, %s22
      %s23 = sphi 0, %s20
      %s24 = sphi 0, %s23
      %s40 = sphi 0, %s24
      %s46 = sphi 0, %s48
      %s49 = sphi 0, %s46
      %s50 = sphi 0, %s49
      %s66 = sphi 0, %s50
    $region4: #{hard_detection_module.1} parent=1 // loop_header_branch
      %13 = sbr.rel (%p11) target = $region8
    $region5: #{hard_detection_module.1} parent=1 // loop_body
      %s15 = ssub.s32 %s10, 1
      %s16 = ssub.s32 %s10, 2
      %s17 = sadd.s32 %s10, 1
      %s18 = ssub.s32 %s10, %s17
      %p19 = scmp.eq.s32.totalorder %s18, 0
      %s21 = sadd.s32 %s20, 1
      %s22 = scalar_select %p19, %s20, %s21
      %p25 = pneg %p19
      %p26 = scmp.eq.s32.totalorder %s10, 1
      %p27 = por %p25, %p26
      %p28 = scmp.ne.s32.totalorder %s20, %s23
      %p29 = scmp.eq.s32.totalorder %s10, 0
      %p30 = por %p28, %p29
      %p31 = scmp.ne.s32.totalorder %s20, %s23
      %p32 = scmp.eq.s32.totalorder %s15, 1
      %p33 = por %p31, %p32
      %p34 = scmp.ne.s32.totalorder %s23, %s24
      %p35 = scmp.eq.s32.totalorder %s15, 0
      %p36 = por %p34, %p35
      %p37 = scmp.ne.s32.totalorder %s23, %s24
      %p38 = scmp.eq.s32.totalorder %s16, 1
      %p39 = por %p37, %p38
      %p41 = scmp.ne.s32.totalorder %s24, %s40
      %p42 = scmp.eq.s32.totalorder %s16, 0
      %p43 = por %p41, %p42
      %s44 = ssub.s32 %s10, %s17
      %p45 = scmp.eq.s32.totalorder %s44, 0
      %s47 = sadd.s32 %s46, 1
      %s48 = scalar_select %p45, %s46, %s47
      %p51 = pneg %p45
      %p52 = scmp.eq.s32.totalorder %s10, 1
      %p53 = por %p51, %p52
      %p54 = scmp.ne.s32.totalorder %s46, %s49
      %p55 = scmp.eq.s32.totalorder %s10, 0
      %p56 = por %p54, %p55
      %p57 = scmp.ne.s32.totalorder %s46, %s49
      %p58 = scmp.eq.s32.totalorder %s15, 1
      %p59 = por %p57, %p58
      %p60 = scmp.ne.s32.totalorder %s49, %s50
      %p61 = scmp.eq.s32.totalorder %s15, 0
      %p62 = por %p60, %p61
      %p63 = scmp.ne.s32.totalorder %s49, %s50
      %p64 = scmp.eq.s32.totalorder %s16, 1
      %p65 = por %p63, %p64
      %p67 = scmp.ne.s32.totalorder %s50, %s66
      %p68 = scmp.eq.s32.totalorder %s16, 0
      %p69 = por %p67, %p68
      %p70 = scmp.le.s32.totalorder 1, %s10
      %p71 = scmp.lt.s32.totalorder %s10, 3
      %p72 = pnand %p70, %p71
      %p73 = pneg %p72
      // Predicated region
      $region9: #{hard_detection_module.1} parent=5 // pred_check
        _
      $region10: #{hard_detection_module.1} parent=5 // pred_check_branch
        %75 = sbr.rel (%p72) target = $region12
      $region11: #{hard_detection_module.1} parent=5 // pred_region
        %s76 = ssub.s32 %s10, 1
      $region12: #{hard_detection_module.1} parent=5 // pred_fallthru
        _
      %p77 = scmp.lt.s32.totalorder %s10, 2
      // Predicated region
      $region13: #{hard_detection_module.1} parent=5 // pred_check
        %p78 = pneg %p77
      $region14: #{hard_detection_module.1} parent=5 // pred_check_branch
        %80 = sbr.rel (%p78) target = $region16
      $region15: #{hard_detection_module.1} parent=5 // pred_region
        // Predicated region
        $region17: #{hard_detection_module.1} parent=15 // pred_check
          %p81 = pneg %p30
        $region18: #{hard_detection_module.1} parent=15 // pred_check_branch
          %83 = sbr.rel (%p81) target = $region20
        $region19: #{hard_detection_module.1} parent=15 // pred_region
          %s84 = sand.u32 %s20, 1
          %s85 = scalar_lea.sflag [#allocation4], %s84
          %s86 = sand.u32 %s20, 1
          %s87 = smul.addr %s86, 256
          %s88 = scalar_lea.vmem [#allocation3], %s87
          %s90 = ssub.s32 4096, 4096
          %91 = vsyncadd %s85, %s90
          %s92 = smul.addr %s10, 32
          %s93 = smul.addr %s92, 128
          %s94 = scalar_lea.hbm %s0, %s93
          %s95 = sshll.u32 %s88, 4
          %s96 = int_to_ptr.vmem [resolvable:$true] %s95
          %101 = dma.hbm_to_vmem [thread:$0]  %s94, 4096, %s96, %s85, 128, 128, 8
        $region20: #{hard_detection_module.1} parent=15 // pred_fallthru
          _
      $region16: #{hard_detection_module.1} parent=5 // pred_fallthru
        _
      %p102 = scmp.le.s32.totalorder 1, %s10
      %p103 = scmp.lt.s32.totalorder %s10, 3
      %p104 = pnand %p102, %p103
      %p105 = pneg %p104
      // Predicated region
      $region21: #{hard_detection_module.1} parent=5 // pred_check
        _
      $region22: #{hard_detection_module.1} parent=5 // pred_check_branch
        %107 = sbr.rel (%p104) target = $region24
      $region23: #{hard_detection_module.1} parent=5 // pred_region
        %s108 = ssub.s32 %s10, 1
        %s109 = sand.u32 %s23, 1
        %s110 = scalar_lea.sflag [#allocation4], %s109
        %s111 = sand.u32 %s23, 1
        %s112 = smul.addr %s111, 256
        %s113 = scalar_lea.vmem [#allocation3], %s112
        // Predicated region
        $region25: #{hard_detection_module.1} parent=23 // pred_check
          %p114 = pneg %p36
        $region26: #{hard_detection_module.1} parent=23 // pred_check_branch
          %116 = sbr.rel (%p114) target = $region28
        $region27: #{hard_detection_module.1} parent=23 // pred_region
          %117 = dma.done %s110, 4096
        $region28: #{hard_detection_module.1} parent=23 // pred_fallthru
          _
        %s118 = sand.u32 %s23, 1
        %s119 = scalar_lea.sflag [#allocation4], %s118
        %s120 = sand.u32 %s23, 1
        %s121 = smul.addr %s120, 256
        %s122 = scalar_lea.vmem [#allocation3], %s121
        %p123 = pneg %p36
        %p124 = pneg %p33
        %p125 = pneg %p62
        %p126 = pneg %p59
        %p127 = scmp.lt.s32.totalorder %s15, 1
        %s128 = scalar_select %p127, %s15, 1
        %s129 = smul.addr %s128, 32
        %s130 = smul.addr %s129, 2
        %s131 = scalar_lea.vmem %s1, %s130
        %p132 = scmp.lt.s32.totalorder %s15, 1
        %s133 = scalar_select %p132, %s15, 1
        %s134 = smul.addr %s133, 32
        %s135 = smul.addr %s134, 2
        %s136 = scalar_lea.vmem %s1, %s135
        %v139 = vld [vmem:[%s113] sm:$0xff]
        %v140 = vld [vmem:[%s113 + $0x8] sm:$0xff]
        %v141 = vld [vmem:[%s113 + $0x10] sm:$0xff]
        %v142 = vld [vmem:[%s113 + $0x18] sm:$0xff]
        %v143 = vld [vmem:[%s113 + $0x20] sm:$0xff]
        %v144 = vld [vmem:[%s113 + $0x28] sm:$0xff]
        %v145 = vld [vmem:[%s113 + $0x30] sm:$0xff]
        %v146 = vld [vmem:[%s113 + $0x38] sm:$0xff]
        %v147 = vld [vmem:[%s113 + $0x40] sm:$0xff]
        %v148 = vld [vmem:[%s113 + $0x48] sm:$0xff]
        %v149 = vld [vmem:[%s113 + $0x50] sm:$0xff]
        %v150 = vld [vmem:[%s113 + $0x58] sm:$0xff]
        %v151 = vld [vmem:[%s113 + $0x60] sm:$0xff]
        %v152 = vld [vmem:[%s113 + $0x68] sm:$0xff]
        %v153 = vld [vmem:[%s113 + $0x70] sm:$0xff]
        %v154 = vld [vmem:[%s113 + $0x78] sm:$0xff]
        %v155 = vld [vmem:[%s113 + $0x80] sm:$0xff]
        %v156 = vld [vmem:[%s113 + $0x88] sm:$0xff]
        %v157 = vld [vmem:[%s113 + $0x90] sm:$0xff]
        %v158 = vld [vmem:[%s113 + $0x98] sm:$0xff]
        %v159 = vld [vmem:[%s113 + $0xa0] sm:$0xff]
        %v160 = vld [vmem:[%s113 + $0xa8] sm:$0xff]
        %v161 = vld [vmem:[%s113 + $0xb0] sm:$0xff]
        %v162 = vld [vmem:[%s113 + $0xb8] sm:$0xff]
        %v163 = vld [vmem:[%s113 + $0xc0] sm:$0xff]
        %v164 = vld [vmem:[%s113 + $0xc8] sm:$0xff]
        %v165 = vld [vmem:[%s113 + $0xd0] sm:$0xff]
        %v166 = vld [vmem:[%s113 + $0xd8] sm:$0xff]
        %v167 = vld [vmem:[%s113 + $0xe0] sm:$0xff]
        %v168 = vld [vmem:[%s113 + $0xe8] sm:$0xff]
        %v169 = vld [vmem:[%s113 + $0xf0] sm:$0xff]
        %v170 = vld [vmem:[%s113 + $0xf8] sm:$0xff]
        %171 = vst [vmem:[#allocation2] sm:$0xff] 0.0
        %172 = vst [vmem:[#allocation2 + $0x8] sm:$0xff] 0.0
        %173 = vst [vmem:[#allocation2 + $0x10] sm:$0x3] 0.0
        %s174 = scalar_lea.vmem [#allocation2], 408
        %175 = vst [vmem:[%s174] sm:$0xff] 0.0
        %176 = vst [vmem:[%s174 + $0x8] sm:$0xff] 0.0
        %177 = vst [vmem:[%s174 + $0x10] sm:$0x3] 0.0
        %178 = vst [vmem:[#allocation2] sm:$0x1] 0.0
        %179 = vst [vmem:[#allocation2 + $0x18] sm:$0x1] 0.0
        %180 = vst [vmem:[#allocation2 + $0x30] sm:$0x1] 0.0
        %181 = vst [vmem:[#allocation2 + $0x48] sm:$0x1] 0.0
        %182 = vst [vmem:[#allocation2 + $0x60] sm:$0x1] 0.0
        %183 = vst [vmem:[#allocation2 + $0x78] sm:$0x1] 0.0
        %184 = vst [vmem:[#allocation2 + $0x90] sm:$0x1] 0.0
        %185 = vst [vmem:[#allocation2 + $0xa8] sm:$0x1] 0.0
        %186 = vst [vmem:[#allocation2 + $0xc0] sm:$0x1] 0.0
        %187 = vst [vmem:[#allocation2 + $0xd8] sm:$0x1] 0.0
        %188 = vst [vmem:[#allocation2 + $0xf0] sm:$0x1] 0.0
        %189 = vst [vmem:[#allocation2 + $0x108] sm:$0x1] 0.0
        %190 = vst [vmem:[#allocation2 + $0x120] sm:$0x1] 0.0
        %191 = vst [vmem:[#allocation2 + $0x138] sm:$0x1] 0.0
        %192 = vst [vmem:[#allocation2 + $0x150] sm:$0x1] 0.0
        %193 = vst [vmem:[#allocation2 + $0x168] sm:$0x1] 0.0
        %194 = vst [vmem:[#allocation2 + $0x180] sm:$0x1] 0.0
        %195 = vst [vmem:[#allocation2 + $0x198] sm:$0x1] 0.0
        %196 = vst [vmem:[#allocation2 + $0x11] sm:$0x1] 0.0
        %197 = vst [vmem:[#allocation2 + $0x29] sm:$0x1] 0.0
        %198 = vst [vmem:[#allocation2 + $0x41] sm:$0x1] 0.0
        %199 = vst [vmem:[#allocation2 + $0x59] sm:$0x1] 0.0
        %200 = vst [vmem:[#allocation2 + $0x71] sm:$0x1] 0.0
        %201 = vst [vmem:[#allocation2 + $0x89] sm:$0x1] 0.0
        %202 = vst [vmem:[#allocation2 + $0xa1] sm:$0x1] 0.0
        %203 = vst [vmem:[#allocation2 + $0xb9] sm:$0x1] 0.0
        %204 = vst [vmem:[#allocation2 + $0xd1] sm:$0x1] 0.0
        %205 = vst [vmem:[#allocation2 + $0xe9] sm:$0x1] 0.0
        %206 = vst [vmem:[#allocation2 + $0x101] sm:$0x1] 0.0
        %207 = vst [vmem:[#allocation2 + $0x119] sm:$0x1] 0.0
        %208 = vst [vmem:[#allocation2 + $0x131] sm:$0x1] 0.0
        %209 = vst [vmem:[#allocation2 + $0x149] sm:$0x1] 0.0
        %210 = vst [vmem:[#allocation2 + $0x161] sm:$0x1] 0.0
        %211 = vst [vmem:[#allocation2 + $0x179] sm:$0x1] 0.0
        %212 = vst [vmem:[#allocation2 + $0x191] sm:$0x1] 0.0
        %213 = vst [vmem:[#allocation2 + $0x1a9] sm:$0x1] 0.0
        %s214 = scalar_lea.vmem [#allocation2], 24
        %215 = vst [vmem:[%s214 + $0x1] sm:$0xff] %v139
        %216 = vst [vmem:[%s214 + $0x9] sm:$0xff] %v140
        %217 = vst [vmem:[%s214 + $0x19] sm:$0xff] %v141
        %218 = vst [vmem:[%s214 + $0x21] sm:$0xff] %v142
        %219 = vst [vmem:[%s214 + $0x31] sm:$0xff] %v143
        %220 = vst [vmem:[%s214 + $0x39] sm:$0xff] %v144
        %221 = vst [vmem:[%s214 + $0x49] sm:$0xff] %v145
        %222 = vst [vmem:[%s214 + $0x51] sm:$0xff] %v146
        %223 = vst [vmem:[%s214 + $0x61] sm:$0xff] %v147
        %224 = vst [vmem:[%s214 + $0x69] sm:$0xff] %v148
        %225 = vst [vmem:[%s214 + $0x79] sm:$0xff] %v149
        %226 = vst [vmem:[%s214 + $0x81] sm:$0xff] %v150
        %227 = vst [vmem:[%s214 + $0x91] sm:$0xff] %v151
        %228 = vst [vmem:[%s214 + $0x99] sm:$0xff] %v152
        %229 = vst [vmem:[%s214 + $0xa9] sm:$0xff] %v153
        %230 = vst [vmem:[%s214 + $0xb1] sm:$0xff] %v154
        %231 = vst [vmem:[%s214 + $0xc1] sm:$0xff] %v155
        %232 = vst [vmem:[%s214 + $0xc9] sm:$0xff] %v156
        %233 = vst [vmem:[%s214 + $0xd9] sm:$0xff] %v157
        %234 = vst [vmem:[%s214 + $0xe1] sm:$0xff] %v158
        %235 = vst [vmem:[%s214 + $0xf1] sm:$0xff] %v159
        %236 = vst [vmem:[%s214 + $0xf9] sm:$0xff] %v160
        %237 = vst [vmem:[%s214 + $0x109] sm:$0xff] %v161
        %238 = vst [vmem:[%s214 + $0x111] sm:$0xff] %v162
        %239 = vst [vmem:[%s214 + $0x121] sm:$0xff] %v163
        %240 = vst [vmem:[%s214 + $0x129] sm:$0xff] %v164
        %241 = vst [vmem:[%s214 + $0x139] sm:$0xff] %v165
        %242 = vst [vmem:[%s214 + $0x141] sm:$0xff] %v166
        %243 = vst [vmem:[%s214 + $0x151] sm:$0xff] %v167
        %244 = vst [vmem:[%s214 + $0x159] sm:$0xff] %v168
        %245 = vst [vmem:[%s214 + $0x169] sm:$0xff] %v169
        %246 = vst [vmem:[%s214 + $0x171] sm:$0xff] %v170
        %v247 = vld [vmem:[%s214 + $0x1] sm:$0xff]
        %v248 = vld [vmem:[%s214 + $0x9] sm:$0xff]
        %v249 = vld [vmem:[%s214 + $0x19] sm:$0xff]
        %v250 = vld [vmem:[%s214 + $0x21] sm:$0xff]
        %v251 = vld [vmem:[%s214 + $0x31] sm:$0xff]
        %v252 = vld [vmem:[%s214 + $0x39] sm:$0xff]
        %v253 = vld [vmem:[%s214 + $0x49] sm:$0xff]
        %v254 = vld [vmem:[%s214 + $0x51] sm:$0xff]
        %v255 = vld [vmem:[%s214 + $0x61] sm:$0xff]
        %v256 = vld [vmem:[%s214 + $0x69] sm:$0xff]
        %v257 = vld [vmem:[%s214 + $0x79] sm:$0xff]
        %v258 = vld [vmem:[%s214 + $0x81] sm:$0xff]
        %v259 = vld [vmem:[%s214 + $0x91] sm:$0xff]
        %v260 = vld [vmem:[%s214 + $0x99] sm:$0xff]
        %v261 = vld [vmem:[%s214 + $0xa9] sm:$0xff]
        %v262 = vld [vmem:[%s214 + $0xb1] sm:$0xff]
        %v263 = vld [vmem:[%s214 + $0xc1] sm:$0xff]
        %v264 = vld [vmem:[%s214 + $0xc9] sm:$0xff]
        %v265 = vld [vmem:[%s214 + $0xd9] sm:$0xff]
        %v266 = vld [vmem:[%s214 + $0xe1] sm:$0xff]
        %v267 = vld [vmem:[%s214 + $0xf1] sm:$0xff]
        %v268 = vld [vmem:[%s214 + $0xf9] sm:$0xff]
        %v269 = vld [vmem:[%s214 + $0x109] sm:$0xff]
        %v270 = vld [vmem:[%s214 + $0x111] sm:$0xff]
        %v271 = vld [vmem:[%s214 + $0x121] sm:$0xff]
        %v272 = vld [vmem:[%s214 + $0x129] sm:$0xff]
        %v273 = vld [vmem:[%s214 + $0x139] sm:$0xff]
        %v274 = vld [vmem:[%s214 + $0x141] sm:$0xff]
        %v275 = vld [vmem:[%s214 + $0x151] sm:$0xff]
        %v276 = vld [vmem:[%s214 + $0x159] sm:$0xff]
        %v277 = vld [vmem:[%s214 + $0x169] sm:$0xff]
        %v278 = vld [vmem:[%s214 + $0x171] sm:$0xff]
        %v279 = vld [vmem:[#allocation2 + $0x1] sm:$0xff]
        %v280 = vld [vmem:[#allocation2 + $0x9] sm:$0xff]
        %v281 = vld [vmem:[#allocation2 + $0x19] sm:$0xff]
        %v282 = vld [vmem:[#allocation2 + $0x21] sm:$0xff]
        %v283 = vld [vmem:[#allocation2 + $0x31] sm:$0xff]
        %v284 = vld [vmem:[#allocation2 + $0x39] sm:$0xff]
        %v285 = vld [vmem:[#allocation2 + $0x49] sm:$0xff]
        %v286 = vld [vmem:[#allocation2 + $0x51] sm:$0xff]
        %v287 = vld [vmem:[#allocation2 + $0x61] sm:$0xff]
        %v288 = vld [vmem:[#allocation2 + $0x69] sm:$0xff]
        %v289 = vld [vmem:[#allocation2 + $0x79] sm:$0xff]
        %v290 = vld [vmem:[#allocation2 + $0x81] sm:$0xff]
        %v291 = vld [vmem:[#allocation2 + $0x91] sm:$0xff]
        %v292 = vld [vmem:[#allocation2 + $0x99] sm:$0xff]
        %v293 = vld [vmem:[#allocation2 + $0xa9] sm:$0xff]
        %v294 = vld [vmem:[#allocation2 + $0xb1] sm:$0xff]
        %v295 = vld [vmem:[#allocation2 + $0xc1] sm:$0xff]
        %v296 = vld [vmem:[#allocation2 + $0xc9] sm:$0xff]
        %v297 = vld [vmem:[#allocation2 + $0xd9] sm:$0xff]
        %v298 = vld [vmem:[#allocation2 + $0xe1] sm:$0xff]
        %v299 = vld [vmem:[#allocation2 + $0xf1] sm:$0xff]
        %v300 = vld [vmem:[#allocation2 + $0xf9] sm:$0xff]
        %v301 = vld [vmem:[#allocation2 + $0x109] sm:$0xff]
        %v302 = vld [vmem:[#allocation2 + $0x111] sm:$0xff]
        %v303 = vld [vmem:[#allocation2 + $0x121] sm:$0xff]
        %v304 = vld [vmem:[#allocation2 + $0x129] sm:$0xff]
        %v305 = vld [vmem:[#allocation2 + $0x139] sm:$0xff]
        %v306 = vld [vmem:[#allocation2 + $0x141] sm:$0xff]
        %v307 = vld [vmem:[#allocation2 + $0x151] sm:$0xff]
        %v308 = vld [vmem:[#allocation2 + $0x159] sm:$0xff]
        %v309 = vld [vmem:[#allocation2 + $0x169] sm:$0xff]
        %v310 = vld [vmem:[#allocation2 + $0x171] sm:$0xff]
        %v311 = vmul.f32 %v247, 2.0
        %v312 = vmul.f32 %v248, 2.0
        %v313 = vmul.f32 %v249, 2.0
        %v314 = vmul.f32 %v250, 2.0
        %v315 = vmul.f32 %v251, 2.0
        %v316 = vmul.f32 %v252, 2.0
        %v317 = vmul.f32 %v253, 2.0
        %v318 = vmul.f32 %v254, 2.0
        %v319 = vmul.f32 %v255, 2.0
        %v320 = vmul.f32 %v256, 2.0
        %v321 = vmul.f32 %v257, 2.0
        %v322 = vmul.f32 %v258, 2.0
        %v323 = vmul.f32 %v259, 2.0
        %v324 = vmul.f32 %v260, 2.0
        %v325 = vmul.f32 %v261, 2.0
        %v326 = vmul.f32 %v262, 2.0
        %v327 = vmul.f32 %v263, 2.0
        %v328 = vmul.f32 %v264, 2.0
        %v329 = vmul.f32 %v265, 2.0
        %v330 = vmul.f32 %v266, 2.0
        %v331 = vmul.f32 %v267, 2.0
        %v332 = vmul.f32 %v268, 2.0
        %v333 = vmul.f32 %v269, 2.0
        %v334 = vmul.f32 %v270, 2.0
        %v335 = vmul.f32 %v271, 2.0
        %v336 = vmul.f32 %v272, 2.0
        %v337 = vmul.f32 %v273, 2.0
        %v338 = vmul.f32 %v274, 2.0
        %v339 = vmul.f32 %v275, 2.0
        %v340 = vmul.f32 %v276, 2.0
        %v341 = vmul.f32 %v277, 2.0
        %v342 = vmul.f32 %v278, 2.0
        %v343 = vsub.f32 %v279, %v311
        %v344 = vsub.f32 %v280, %v312
        %v345 = vsub.f32 %v281, %v313
        %v346 = vsub.f32 %v282, %v314
        %v347 = vsub.f32 %v283, %v315
        %v348 = vsub.f32 %v284, %v316
        %v349 = vsub.f32 %v285, %v317
        %v350 = vsub.f32 %v286, %v318
        %v351 = vsub.f32 %v287, %v319
        %v352 = vsub.f32 %v288, %v320
        %v353 = vsub.f32 %v289, %v321
        %v354 = vsub.f32 %v290, %v322
        %v355 = vsub.f32 %v291, %v323
        %v356 = vsub.f32 %v292, %v324
        %v357 = vsub.f32 %v293, %v325
        %v358 = vsub.f32 %v294, %v326
        %v359 = vsub.f32 %v295, %v327
        %v360 = vsub.f32 %v296, %v328
        %v361 = vsub.f32 %v297, %v329
        %v362 = vsub.f32 %v298, %v330
        %v363 = vsub.f32 %v299, %v331
        %v364 = vsub.f32 %v300, %v332
        %v365 = vsub.f32 %v301, %v333
        %v366 = vsub.f32 %v302, %v334
        %v367 = vsub.f32 %v303, %v335
        %v368 = vsub.f32 %v304, %v336
        %v369 = vsub.f32 %v305, %v337
        %v370 = vsub.f32 %v306, %v338
        %v371 = vsub.f32 %v307, %v339
        %v372 = vsub.f32 %v308, %v340
        %v373 = vsub.f32 %v309, %v341
        %v374 = vsub.f32 %v310, %v342
        %s375 = scalar_lea.vmem [#allocation2], 48
        %v376 = vld [vmem:[%s375 + $0x1] sm:$0xff]
        %v377 = vld [vmem:[%s375 + $0x9] sm:$0xff]
        %v378 = vld [vmem:[%s375 + $0x19] sm:$0xff]
        %v379 = vld [vmem:[%s375 + $0x21] sm:$0xff]
        %v380 = vld [vmem:[%s375 + $0x31] sm:$0xff]
        %v381 = vld [vmem:[%s375 + $0x39] sm:$0xff]
        %v382 = vld [vmem:[%s375 + $0x49] sm:$0xff]
        %v383 = vld [vmem:[%s375 + $0x51] sm:$0xff]
        %v384 = vld [vmem:[%s375 + $0x61] sm:$0xff]
        %v385 = vld [vmem:[%s375 + $0x69] sm:$0xff]
        %v386 = vld [vmem:[%s375 + $0x79] sm:$0xff]
        %v387 = vld [vmem:[%s375 + $0x81] sm:$0xff]
        %v388 = vld [vmem:[%s375 + $0x91] sm:$0xff]
        %v389 = vld [vmem:[%s375 + $0x99] sm:$0xff]
        %v390 = vld [vmem:[%s375 + $0xa9] sm:$0xff]
        %v391 = vld [vmem:[%s375 + $0xb1] sm:$0xff]
        %v392 = vld [vmem:[%s375 + $0xc1] sm:$0xff]
        %v393 = vld [vmem:[%s375 + $0xc9] sm:$0xff]
        %v394 = vld [vmem:[%s375 + $0xd9] sm:$0xff]
        %v395 = vld [vmem:[%s375 + $0xe1] sm:$0xff]
        %v396 = vld [vmem:[%s375 + $0xf1] sm:$0xff]
        %v397 = vld [vmem:[%s375 + $0xf9] sm:$0xff]
        %v398 = vld [vmem:[%s375 + $0x109] sm:$0xff]
        %v399 = vld [vmem:[%s375 + $0x111] sm:$0xff]
        %v400 = vld [vmem:[%s375 + $0x121] sm:$0xff]
        %v401 = vld [vmem:[%s375 + $0x129] sm:$0xff]
        %v402 = vld [vmem:[%s375 + $0x139] sm:$0xff]
        %v403 = vld [vmem:[%s375 + $0x141] sm:$0xff]
        %v404 = vld [vmem:[%s375 + $0x151] sm:$0xff]
        %v405 = vld [vmem:[%s375 + $0x159] sm:$0xff]
        %v406 = vld [vmem:[%s375 + $0x169] sm:$0xff]
        %v407 = vld [vmem:[%s375 + $0x171] sm:$0xff]
        %v408 = vadd.f32 %v343, %v376
        %v409 = vadd.f32 %v344, %v377
        %v410 = vadd.f32 %v345, %v378
        %v411 = vadd.f32 %v346, %v379
        %v412 = vadd.f32 %v347, %v380
        %v413 = vadd.f32 %v348, %v381
        %v414 = vadd.f32 %v349, %v382
        %v415 = vadd.f32 %v350, %v383
        %v416 = vadd.f32 %v351, %v384
        %v417 = vadd.f32 %v352, %v385
        %v418 = vadd.f32 %v353, %v386
        %v419 = vadd.f32 %v354, %v387
        %v420 = vadd.f32 %v355, %v388
        %v421 = vadd.f32 %v356, %v389
        %v422 = vadd.f32 %v357, %v390
        %v423 = vadd.f32 %v358, %v391
        %v424 = vadd.f32 %v359, %v392
        %v425 = vadd.f32 %v360, %v393
        %v426 = vadd.f32 %v361, %v394
        %v427 = vadd.f32 %v362, %v395
        %v428 = vadd.f32 %v363, %v396
        %v429 = vadd.f32 %v364, %v397
        %v430 = vadd.f32 %v365, %v398
        %v431 = vadd.f32 %v366, %v399
        %v432 = vadd.f32 %v367, %v400
        %v433 = vadd.f32 %v368, %v401
        %v434 = vadd.f32 %v369, %v402
        %v435 = vadd.f32 %v370, %v403
        %v436 = vadd.f32 %v371, %v404
        %v437 = vadd.f32 %v372, %v405
        %v438 = vadd.f32 %v373, %v406
        %v439 = vadd.f32 %v374, %v407
        %v440 = vld [vmem:[%s214] sm:$0xff]
        %v441 = vld [vmem:[%s214 + $0x8] sm:$0xff]
        %v442 = vld [vmem:[%s214 + $0x18] sm:$0xff]
        %v443 = vld [vmem:[%s214 + $0x20] sm:$0xff]
        %v444 = vld [vmem:[%s214 + $0x30] sm:$0xff]
        %v445 = vld [vmem:[%s214 + $0x38] sm:$0xff]
        %v446 = vld [vmem:[%s214 + $0x48] sm:$0xff]
        %v447 = vld [vmem:[%s214 + $0x50] sm:$0xff]
        %v448 = vld [vmem:[%s214 + $0x60] sm:$0xff]
        %v449 = vld [vmem:[%s214 + $0x68] sm:$0xff]
        %v450 = vld [vmem:[%s214 + $0x78] sm:$0xff]
        %v451 = vld [vmem:[%s214 + $0x80] sm:$0xff]
        %v452 = vld [vmem:[%s214 + $0x90] sm:$0xff]
        %v453 = vld [vmem:[%s214 + $0x98] sm:$0xff]
        %v454 = vld [vmem:[%s214 + $0xa8] sm:$0xff]
        %v455 = vld [vmem:[%s214 + $0xb0] sm:$0xff]
        %v456 = vld [vmem:[%s214 + $0xc0] sm:$0xff]
        %v457 = vld [vmem:[%s214 + $0xc8] sm:$0xff]
        %v458 = vld [vmem:[%s214 + $0xd8] sm:$0xff]
        %v459 = vld [vmem:[%s214 + $0xe0] sm:$0xff]
        %v460 = vld [vmem:[%s214 + $0xf0] sm:$0xff]
        %v461 = vld [vmem:[%s214 + $0xf8] sm:$0xff]
        %v462 = vld [vmem:[%s214 + $0x108] sm:$0xff]
        %v463 = vld [vmem:[%s214 + $0x110] sm:$0xff]
        %v464 = vld [vmem:[%s214 + $0x120] sm:$0xff]
        %v465 = vld [vmem:[%s214 + $0x128] sm:$0xff]
        %v466 = vld [vmem:[%s214 + $0x138] sm:$0xff]
        %v467 = vld [vmem:[%s214 + $0x140] sm:$0xff]
        %v468 = vld [vmem:[%s214 + $0x150] sm:$0xff]
        %v469 = vld [vmem:[%s214 + $0x158] sm:$0xff]
        %v470 = vld [vmem:[%s214 + $0x168] sm:$0xff]
        %v471 = vld [vmem:[%s214 + $0x170] sm:$0xff]
        %v472 = vsub.f32 %v440, %v311
        %v473 = vsub.f32 %v441, %v312
        %v474 = vsub.f32 %v442, %v313
        %v475 = vsub.f32 %v443, %v314
        %v476 = vsub.f32 %v444, %v315
        %v477 = vsub.f32 %v445, %v316
        %v478 = vsub.f32 %v446, %v317
        %v479 = vsub.f32 %v447, %v318
        %v480 = vsub.f32 %v448, %v319
        %v481 = vsub.f32 %v449, %v320
        %v482 = vsub.f32 %v450, %v321
        %v483 = vsub.f32 %v451, %v322
        %v484 = vsub.f32 %v452, %v323
        %v485 = vsub.f32 %v453, %v324
        %v486 = vsub.f32 %v454, %v325
        %v487 = vsub.f32 %v455, %v326
        %v488 = vsub.f32 %v456, %v327
        %v489 = vsub.f32 %v457, %v328
        %v490 = vsub.f32 %v458, %v329
        %v491 = vsub.f32 %v459, %v330
        %v492 = vsub.f32 %v460, %v331
        %v493 = vsub.f32 %v461, %v332
        %v494 = vsub.f32 %v462, %v333
        %v495 = vsub.f32 %v463, %v334
        %v496 = vsub.f32 %v464, %v335
        %v497 = vsub.f32 %v465, %v336
        %v498 = vsub.f32 %v466, %v337
        %v499 = vsub.f32 %v467, %v338
        %v500 = vsub.f32 %v468, %v339
        %v501 = vsub.f32 %v469, %v340
        %v502 = vsub.f32 %v470, %v341
        %v503 = vsub.f32 %v471, %v342
        %v504 = vld [vmem:[%s214 + $0x2] sm:$0xff]
        %v505 = vld [vmem:[%s214 + $0xa] sm:$0xff]
        %v506 = vld [vmem:[%s214 + $0x1a] sm:$0xff]
        %v507 = vld [vmem:[%s214 + $0x22] sm:$0xff]
        %v508 = vld [vmem:[%s214 + $0x32] sm:$0xff]
        %v509 = vld [vmem:[%s214 + $0x3a] sm:$0xff]
        %v510 = vld [vmem:[%s214 + $0x4a] sm:$0xff]
        %v511 = vld [vmem:[%s214 + $0x52] sm:$0xff]
        %v512 = vld [vmem:[%s214 + $0x62] sm:$0xff]
        %v513 = vld [vmem:[%s214 + $0x6a] sm:$0xff]
        %v514 = vld [vmem:[%s214 + $0x7a] sm:$0xff]
        %v515 = vld [vmem:[%s214 + $0x82] sm:$0xff]
        %v516 = vld [vmem:[%s214 + $0x92] sm:$0xff]
        %v517 = vld [vmem:[%s214 + $0x9a] sm:$0xff]
        %v518 = vld [vmem:[%s214 + $0xaa] sm:$0xff]
        %v519 = vld [vmem:[%s214 + $0xb2] sm:$0xff]
        %v520 = vld [vmem:[%s214 + $0xc2] sm:$0xff]
        %v521 = vld [vmem:[%s214 + $0xca] sm:$0xff]
        %v522 = vld [vmem:[%s214 + $0xda] sm:$0xff]
        %v523 = vld [vmem:[%s214 + $0xe2] sm:$0xff]
        %v524 = vld [vmem:[%s214 + $0xf2] sm:$0xff]
        %v525 = vld [vmem:[%s214 + $0xfa] sm:$0xff]
        %v526 = vld [vmem:[%s214 + $0x10a] sm:$0xff]
        %v527 = vld [vmem:[%s214 + $0x112] sm:$0xff]
        %v528 = vld [vmem:[%s214 + $0x122] sm:$0xff]
        %v529 = vld [vmem:[%s214 + $0x12a] sm:$0xff]
        %v530 = vld [vmem:[%s214 + $0x13a] sm:$0xff]
        %v531 = vld [vmem:[%s214 + $0x142] sm:$0xff]
        %v532 = vld [vmem:[%s214 + $0x152] sm:$0xff]
        %v533 = vld [vmem:[%s214 + $0x15a] sm:$0xff]
        %v534 = vld [vmem:[%s214 + $0x16a] sm:$0xff]
        %v535 = vld [vmem:[%s214 + $0x172] sm:$0xff]
        %v536 = vadd.f32 %v472, %v504
        %v537 = vadd.f32 %v473, %v505
        %v538 = vadd.f32 %v474, %v506
        %v539 = vadd.f32 %v475, %v507
        %v540 = vadd.f32 %v476, %v508
        %v541 = vadd.f32 %v477, %v509
        %v542 = vadd.f32 %v478, %v510
        %v543 = vadd.f32 %v479, %v511
        %v544 = vadd.f32 %v480, %v512
        %v545 = vadd.f32 %v481, %v513
        %v546 = vadd.f32 %v482, %v514
        %v547 = vadd.f32 %v483, %v515
        %v548 = vadd.f32 %v484, %v516
        %v549 = vadd.f32 %v485, %v517
        %v550 = vadd.f32 %v486, %v518
        %v551 = vadd.f32 %v487, %v519
        %v552 = vadd.f32 %v488, %v520
        %v553 = vadd.f32 %v489, %v521
        %v554 = vadd.f32 %v490, %v522
        %v555 = vadd.f32 %v491, %v523
        %v556 = vadd.f32 %v492, %v524
        %v557 = vadd.f32 %v493, %v525
        %v558 = vadd.f32 %v494, %v526
        %v559 = vadd.f32 %v495, %v527
        %v560 = vadd.f32 %v496, %v528
        %v561 = vadd.f32 %v497, %v529
        %v562 = vadd.f32 %v498, %v530
        %v563 = vadd.f32 %v499, %v531
        %v564 = vadd.f32 %v500, %v532
        %v565 = vadd.f32 %v501, %v533
        %v566 = vadd.f32 %v502, %v534
        %v567 = vadd.f32 %v503, %v535
        %v568 = vld [vmem:[#allocation2] sm:$0xff]
        %v569 = vld [vmem:[#allocation2 + $0x8] sm:$0xff]
        %v570 = vld [vmem:[#allocation2 + $0x18] sm:$0xff]
        %v571 = vld [vmem:[#allocation2 + $0x20] sm:$0xff]
        %v572 = vld [vmem:[#allocation2 + $0x30] sm:$0xff]
        %v573 = vld [vmem:[#allocation2 + $0x38] sm:$0xff]
        %v574 = vld [vmem:[#allocation2 + $0x48] sm:$0xff]
        %v575 = vld [vmem:[#allocation2 + $0x50] sm:$0xff]
        %v576 = vld [vmem:[#allocation2 + $0x60] sm:$0xff]
        %v577 = vld [vmem:[#allocation2 + $0x68] sm:$0xff]
        %v578 = vld [vmem:[#allocation2 + $0x78] sm:$0xff]
        %v579 = vld [vmem:[#allocation2 + $0x80] sm:$0xff]
        %v580 = vld [vmem:[#allocation2 + $0x90] sm:$0xff]
        %v581 = vld [vmem:[#allocation2 + $0x98] sm:$0xff]
        %v582 = vld [vmem:[#allocation2 + $0xa8] sm:$0xff]
        %v583 = vld [vmem:[#allocation2 + $0xb0] sm:$0xff]
        %v584 = vld [vmem:[#allocation2 + $0xc0] sm:$0xff]
        %v585 = vld [vmem:[#allocation2 + $0xc8] sm:$0xff]
        %v586 = vld [vmem:[#allocation2 + $0xd8] sm:$0xff]
        %v587 = vld [vmem:[#allocation2 + $0xe0] sm:$0xff]
        %v588 = vld [vmem:[#allocation2 + $0xf0] sm:$0xff]
        %v589 = vld [vmem:[#allocation2 + $0xf8] sm:$0xff]
        %v590 = vld [vmem:[#allocation2 + $0x108] sm:$0xff]
        %v591 = vld [vmem:[#allocation2 + $0x110] sm:$0xff]
        %v592 = vld [vmem:[#allocation2 + $0x120] sm:$0xff]
        %v593 = vld [vmem:[#allocation2 + $0x128] sm:$0xff]
        %v594 = vld [vmem:[#allocation2 + $0x138] sm:$0xff]
        %v595 = vld [vmem:[#allocation2 + $0x140] sm:$0xff]
        %v596 = vld [vmem:[#allocation2 + $0x150] sm:$0xff]
        %v597 = vld [vmem:[#allocation2 + $0x158] sm:$0xff]
        %v598 = vld [vmem:[#allocation2 + $0x168] sm:$0xff]
        %v599 = vld [vmem:[#allocation2 + $0x170] sm:$0xff]
        %v600 = vld [vmem:[#allocation2 + $0x2] sm:$0xff]
        %v601 = vld [vmem:[#allocation2 + $0xa] sm:$0xff]
        %v602 = vld [vmem:[#allocation2 + $0x1a] sm:$0xff]
        %v603 = vld [vmem:[#allocation2 + $0x22] sm:$0xff]
        %v604 = vld [vmem:[#allocation2 + $0x32] sm:$0xff]
        %v605 = vld [vmem:[#allocation2 + $0x3a] sm:$0xff]
        %v606 = vld [vmem:[#allocation2 + $0x4a] sm:$0xff]
        %v607 = vld [vmem:[#allocation2 + $0x52] sm:$0xff]
        %v608 = vld [vmem:[#allocation2 + $0x62] sm:$0xff]
        %v609 = vld [vmem:[#allocation2 + $0x6a] sm:$0xff]
        %v610 = vld [vmem:[#allocation2 + $0x7a] sm:$0xff]
        %v611 = vld [vmem:[#allocation2 + $0x82] sm:$0xff]
        %v612 = vld [vmem:[#allocation2 + $0x92] sm:$0xff]
        %v613 = vld [vmem:[#allocation2 + $0x9a] sm:$0xff]
        %v614 = vld [vmem:[#allocation2 + $0xaa] sm:$0xff]
        %v615 = vld [vmem:[#allocation2 + $0xb2] sm:$0xff]
        %v616 = vld [vmem:[#allocation2 + $0xc2] sm:$0xff]
        %v617 = vld [vmem:[#allocation2 + $0xca] sm:$0xff]
        %v618 = vld [vmem:[#allocation2 + $0xda] sm:$0xff]
        %v619 = vld [vmem:[#allocation2 + $0xe2] sm:$0xff]
        %v620 = vld [vmem:[#allocation2 + $0xf2] sm:$0xff]
        %v621 = vld [vmem:[#allocation2 + $0xfa] sm:$0xff]
        %v622 = vld [vmem:[#allocation2 + $0x10a] sm:$0xff]
        %v623 = vld [vmem:[#allocation2 + $0x112] sm:$0xff]
        %v624 = vld [vmem:[#allocation2 + $0x122] sm:$0xff]
        %v625 = vld [vmem:[#allocation2 + $0x12a] sm:$0xff]
        %v626 = vld [vmem:[#allocation2 + $0x13a] sm:$0xff]
        %v627 = vld [vmem:[#allocation2 + $0x142] sm:$0xff]
        %v628 = vld [vmem:[#allocation2 + $0x152] sm:$0xff]
        %v629 = vld [vmem:[#allocation2 + $0x15a] sm:$0xff]
        %v630 = vld [vmem:[#allocation2 + $0x16a] sm:$0xff]
        %v631 = vld [vmem:[#allocation2 + $0x172] sm:$0xff]
        %v632 = vsub.f32 %v568, %v600
        %v633 = vsub.f32 %v569, %v601
        %v634 = vsub.f32 %v570, %v602
        %v635 = vsub.f32 %v571, %v603
        %v636 = vsub.f32 %v572, %v604
        %v637 = vsub.f32 %v573, %v605
        %v638 = vsub.f32 %v574, %v606
        %v639 = vsub.f32 %v575, %v607
        %v640 = vsub.f32 %v576, %v608
        %v641 = vsub.f32 %v577, %v609
        %v642 = vsub.f32 %v578, %v610
        %v643 = vsub.f32 %v579, %v611
        %v644 = vsub.f32 %v580, %v612
        %v645 = vsub.f32 %v581, %v613
        %v646 = vsub.f32 %v582, %v614
        %v647 = vsub.f32 %v583, %v615
        %v648 = vsub.f32 %v584, %v616
        %v649 = vsub.f32 %v585, %v617
        %v650 = vsub.f32 %v586, %v618
        %v651 = vsub.f32 %v587, %v619
        %v652 = vsub.f32 %v588, %v620
        %v653 = vsub.f32 %v589, %v621
        %v654 = vsub.f32 %v590, %v622
        %v655 = vsub.f32 %v591, %v623
        %v656 = vsub.f32 %v592, %v624
        %v657 = vsub.f32 %v593, %v625
        %v658 = vsub.f32 %v594, %v626
        %v659 = vsub.f32 %v595, %v627
        %v660 = vsub.f32 %v596, %v628
        %v661 = vsub.f32 %v597, %v629
        %v662 = vsub.f32 %v598, %v630
        %v663 = vsub.f32 %v599, %v631
        %v664 = vld [vmem:[%s375] sm:$0xff]
        %v665 = vld [vmem:[%s375 + $0x8] sm:$0xff]
        %v666 = vld [vmem:[%s375 + $0x18] sm:$0xff]
        %v667 = vld [vmem:[%s375 + $0x20] sm:$0xff]
        %v668 = vld [vmem:[%s375 + $0x30] sm:$0xff]
        %v669 = vld [vmem:[%s375 + $0x38] sm:$0xff]
        %v670 = vld [vmem:[%s375 + $0x48] sm:$0xff]
        %v671 = vld [vmem:[%s375 + $0x50] sm:$0xff]
        %v672 = vld [vmem:[%s375 + $0x60] sm:$0xff]
        %v673 = vld [vmem:[%s375 + $0x68] sm:$0xff]
        %v674 = vld [vmem:[%s375 + $0x78] sm:$0xff]
        %v675 = vld [vmem:[%s375 + $0x80] sm:$0xff]
        %v676 = vld [vmem:[%s375 + $0x90] sm:$0xff]
        %v677 = vld [vmem:[%s375 + $0x98] sm:$0xff]
        %v678 = vld [vmem:[%s375 + $0xa8] sm:$0xff]
        %v679 = vld [vmem:[%s375 + $0xb0] sm:$0xff]
        %v680 = vld [vmem:[%s375 + $0xc0] sm:$0xff]
        %v681 = vld [vmem:[%s375 + $0xc8] sm:$0xff]
        %v682 = vld [vmem:[%s375 + $0xd8] sm:$0xff]
        %v683 = vld [vmem:[%s375 + $0xe0] sm:$0xff]
        %v684 = vld [vmem:[%s375 + $0xf0] sm:$0xff]
        %v685 = vld [vmem:[%s375 + $0xf8] sm:$0xff]
        %v686 = vld [vmem:[%s375 + $0x108] sm:$0xff]
        %v687 = vld [vmem:[%s375 + $0x110] sm:$0xff]
        %v688 = vld [vmem:[%s375 + $0x120] sm:$0xff]
        %v689 = vld [vmem:[%s375 + $0x128] sm:$0xff]
        %v690 = vld [vmem:[%s375 + $0x138] sm:$0xff]
        %v691 = vld [vmem:[%s375 + $0x140] sm:$0xff]
        %v692 = vld [vmem:[%s375 + $0x150] sm:$0xff]
        %v693 = vld [vmem:[%s375 + $0x158] sm:$0xff]
        %v694 = vld [vmem:[%s375 + $0x168] sm:$0xff]
        %v695 = vld [vmem:[%s375 + $0x170] sm:$0xff]
        %v696 = vsub.f32 %v632, %v664
        %v697 = vsub.f32 %v633, %v665
        %v698 = vsub.f32 %v634, %v666
        %v699 = vsub.f32 %v635, %v667
        %v700 = vsub.f32 %v636, %v668
        %v701 = vsub.f32 %v637, %v669
        %v702 = vsub.f32 %v638, %v670
        %v703 = vsub.f32 %v639, %v671
        %v704 = vsub.f32 %v640, %v672
        %v705 = vsub.f32 %v641, %v673
        %v706 = vsub.f32 %v642, %v674
        %v707 = vsub.f32 %v643, %v675
        %v708 = vsub.f32 %v644, %v676
        %v709 = vsub.f32 %v645, %v677
        %v710 = vsub.f32 %v646, %v678
        %v711 = vsub.f32 %v647, %v679
        %v712 = vsub.f32 %v648, %v680
        %v713 = vsub.f32 %v649, %v681
        %v714 = vsub.f32 %v650, %v682
        %v715 = vsub.f32 %v651, %v683
        %v716 = vsub.f32 %v652, %v684
        %v717 = vsub.f32 %v653, %v685
        %v718 = vsub.f32 %v654, %v686
        %v719 = vsub.f32 %v655, %v687
        %v720 = vsub.f32 %v656, %v688
        %v721 = vsub.f32 %v657, %v689
        %v722 = vsub.f32 %v658, %v690
        %v723 = vsub.f32 %v659, %v691
        %v724 = vsub.f32 %v660, %v692
        %v725 = vsub.f32 %v661, %v693
        %v726 = vsub.f32 %v662, %v694
        %v727 = vsub.f32 %v663, %v695
        %v728 = vld [vmem:[%s375 + $0x2] sm:$0xff]
        %v729 = vld [vmem:[%s375 + $0xa] sm:$0xff]
        %v730 = vld [vmem:[%s375 + $0x1a] sm:$0xff]
        %v731 = vld [vmem:[%s375 + $0x22] sm:$0xff]
        %v732 = vld [vmem:[%s375 + $0x32] sm:$0xff]
        %v733 = vld [vmem:[%s375 + $0x3a] sm:$0xff]
        %v734 = vld [vmem:[%s375 + $0x4a] sm:$0xff]
        %v735 = vld [vmem:[%s375 + $0x52] sm:$0xff]
        %v736 = vld [vmem:[%s375 + $0x62] sm:$0xff]
        %v737 = vld [vmem:[%s375 + $0x6a] sm:$0xff]
        %v738 = vld [vmem:[%s375 + $0x7a] sm:$0xff]
        %v739 = vld [vmem:[%s375 + $0x82] sm:$0xff]
        %v740 = vld [vmem:[%s375 + $0x92] sm:$0xff]
        %v741 = vld [vmem:[%s375 + $0x9a] sm:$0xff]
        %v742 = vld [vmem:[%s375 + $0xaa] sm:$0xff]
        %v743 = vld [vmem:[%s375 + $0xb2] sm:$0xff]
        %v744 = vld [vmem:[%s375 + $0xc2] sm:$0xff]
        %v745 = vld [vmem:[%s375 + $0xca] sm:$0xff]
        %v746 = vld [vmem:[%s375 + $0xda] sm:$0xff]
        %v747 = vld [vmem:[%s375 + $0xe2] sm:$0xff]
        %v748 = vld [vmem:[%s375 + $0xf2] sm:$0xff]
        %v749 = vld [vmem:[%s375 + $0xfa] sm:$0xff]
        %v750 = vld [vmem:[%s375 + $0x10a] sm:$0xff]
        %v751 = vld [vmem:[%s375 + $0x112] sm:$0xff]
        %v752 = vld [vmem:[%s375 + $0x122] sm:$0xff]
        %v753 = vld [vmem:[%s375 + $0x12a] sm:$0xff]
        %v754 = vld [vmem:[%s375 + $0x13a] sm:$0xff]
        %v755 = vld [vmem:[%s375 + $0x142] sm:$0xff]
        %v756 = vld [vmem:[%s375 + $0x152] sm:$0xff]
        %v757 = vld [vmem:[%s375 + $0x15a] sm:$0xff]
        %v758 = vld [vmem:[%s375 + $0x16a] sm:$0xff]
        %v759 = vld [vmem:[%s375 + $0x172] sm:$0xff]
        %v760 = vadd.f32 %v696, %v728
        %v761 = vadd.f32 %v697, %v729
        %v762 = vadd.f32 %v698, %v730
        %v763 = vadd.f32 %v699, %v731
        %v764 = vadd.f32 %v700, %v732
        %v765 = vadd.f32 %v701, %v733
        %v766 = vadd.f32 %v702, %v734
        %v767 = vadd.f32 %v703, %v735
        %v768 = vadd.f32 %v704, %v736
        %v769 = vadd.f32 %v705, %v737
        %v770 = vadd.f32 %v706, %v738
        %v771 = vadd.f32 %v707, %v739
        %v772 = vadd.f32 %v708, %v740
        %v773 = vadd.f32 %v709, %v741
        %v774 = vadd.f32 %v710, %v742
        %v775 = vadd.f32 %v711, %v743
        %v776 = vadd.f32 %v712, %v744
        %v777 = vadd.f32 %v713, %v745
        %v778 = vadd.f32 %v714, %v746
        %v779 = vadd.f32 %v715, %v747
        %v780 = vadd.f32 %v716, %v748
        %v781 = vadd.f32 %v717, %v749
        %v782 = vadd.f32 %v718, %v750
        %v783 = vadd.f32 %v719, %v751
        %v784 = vadd.f32 %v720, %v752
        %v785 = vadd.f32 %v721, %v753
        %v786 = vadd.f32 %v722, %v754
        %v787 = vadd.f32 %v723, %v755
        %v788 = vadd.f32 %v724, %v756
        %v789 = vadd.f32 %v725, %v757
        %v790 = vadd.f32 %v726, %v758
        %v791 = vadd.f32 %v727, %v759
        %v792 = vmul.f32 %v760, 0.25
        %v793 = vmul.f32 %v761, 0.25
        %v794 = vmul.f32 %v762, 0.25
        %v795 = vmul.f32 %v763, 0.25
        %v796 = vmul.f32 %v764, 0.25
        %v797 = vmul.f32 %v765, 0.25
        %v798 = vmul.f32 %v766, 0.25
        %v799 = vmul.f32 %v767, 0.25
        %v800 = vmul.f32 %v768, 0.25
        %v801 = vmul.f32 %v769, 0.25
        %v802 = vmul.f32 %v770, 0.25
        %v803 = vmul.f32 %v771, 0.25
        %v804 = vmul.f32 %v772, 0.25
        %v805 = vmul.f32 %v773, 0.25
        %v806 = vmul.f32 %v774, 0.25
        %v807 = vmul.f32 %v775, 0.25
        %v808 = vmul.f32 %v776, 0.25
        %v809 = vmul.f32 %v777, 0.25
        %v810 = vmul.f32 %v778, 0.25
        %v811 = vmul.f32 %v779, 0.25
        %v812 = vmul.f32 %v780, 0.25
        %v813 = vmul.f32 %v781, 0.25
        %v814 = vmul.f32 %v782, 0.25
        %v815 = vmul.f32 %v783, 0.25
        %v816 = vmul.f32 %v784, 0.25
        %v817 = vmul.f32 %v785, 0.25
        %v818 = vmul.f32 %v786, 0.25
        %v819 = vmul.f32 %v787, 0.25
        %v820 = vmul.f32 %v788, 0.25
        %v821 = vmul.f32 %v789, 0.25
        %v822 = vmul.f32 %v790, 0.25
        %v823 = vmul.f32 %v791, 0.25
        %v824 = vmul.f32 %v408, %v536
        %v825 = vmul.f32 %v409, %v537
        %v826 = vmul.f32 %v410, %v538
        %v827 = vmul.f32 %v411, %v539
        %v828 = vmul.f32 %v412, %v540
        %v829 = vmul.f32 %v413, %v541
        %v830 = vmul.f32 %v414, %v542
        %v831 = vmul.f32 %v415, %v543
        %v832 = vmul.f32 %v416, %v544
        %v833 = vmul.f32 %v417, %v545
        %v834 = vmul.f32 %v418, %v546
        %v835 = vmul.f32 %v419, %v547
        %v836 = vmul.f32 %v420, %v548
        %v837 = vmul.f32 %v421, %v549
        %v838 = vmul.f32 %v422, %v550
        %v839 = vmul.f32 %v423, %v551
        %v840 = vmul.f32 %v424, %v552
        %v841 = vmul.f32 %v425, %v553
        %v842 = vmul.f32 %v426, %v554
        %v843 = vmul.f32 %v427, %v555
        %v844 = vmul.f32 %v428, %v556
        %v845 = vmul.f32 %v429, %v557
        %v846 = vmul.f32 %v430, %v558
        %v847 = vmul.f32 %v431, %v559
        %v848 = vmul.f32 %v432, %v560
        %v849 = vmul.f32 %v433, %v561
        %v850 = vmul.f32 %v434, %v562
        %v851 = vmul.f32 %v435, %v563
        %v852 = vmul.f32 %v436, %v564
        %v853 = vmul.f32 %v437, %v565
        %v854 = vmul.f32 %v438, %v566
        %v855 = vmul.f32 %v439, %v567
        %v856 = vmul.f32 %v792, %v792
        %v857 = vmul.f32 %v793, %v793
        %v858 = vmul.f32 %v794, %v794
        %v859 = vmul.f32 %v795, %v795
        %v860 = vmul.f32 %v796, %v796
        %v861 = vmul.f32 %v797, %v797
        %v862 = vmul.f32 %v798, %v798
        %v863 = vmul.f32 %v799, %v799
        %v864 = vmul.f32 %v800, %v800
        %v865 = vmul.f32 %v801, %v801
        %v866 = vmul.f32 %v802, %v802
        %v867 = vmul.f32 %v803, %v803
        %v868 = vmul.f32 %v804, %v804
        %v869 = vmul.f32 %v805, %v805
        %v870 = vmul.f32 %v806, %v806
        %v871 = vmul.f32 %v807, %v807
        %v872 = vmul.f32 %v808, %v808
        %v873 = vmul.f32 %v809, %v809
        %v874 = vmul.f32 %v810, %v810
        %v875 = vmul.f32 %v811, %v811
        %v876 = vmul.f32 %v812, %v812
        %v877 = vmul.f32 %v813, %v813
        %v878 = vmul.f32 %v814, %v814
        %v879 = vmul.f32 %v815, %v815
        %v880 = vmul.f32 %v816, %v816
        %v881 = vmul.f32 %v817, %v817
        %v882 = vmul.f32 %v818, %v818
        %v883 = vmul.f32 %v819, %v819
        %v884 = vmul.f32 %v820, %v820
        %v885 = vmul.f32 %v821, %v821
        %v886 = vmul.f32 %v822, %v822
        %v887 = vmul.f32 %v823, %v823
        %v888 = vsub.f32 %v824, %v856
        %v889 = vsub.f32 %v825, %v857
        %v890 = vsub.f32 %v826, %v858
        %v891 = vsub.f32 %v827, %v859
        %v892 = vsub.f32 %v828, %v860
        %v893 = vsub.f32 %v829, %v861
        %v894 = vsub.f32 %v830, %v862
        %v895 = vsub.f32 %v831, %v863
        %v896 = vsub.f32 %v832, %v864
        %v897 = vsub.f32 %v833, %v865
        %v898 = vsub.f32 %v834, %v866
        %v899 = vsub.f32 %v835, %v867
        %v900 = vsub.f32 %v836, %v868
        %v901 = vsub.f32 %v837, %v869
        %v902 = vsub.f32 %v838, %v870
        %v903 = vsub.f32 %v839, %v871
        %v904 = vsub.f32 %v840, %v872
        %v905 = vsub.f32 %v841, %v873
        %v906 = vsub.f32 %v842, %v874
        %v907 = vsub.f32 %v843, %v875
        %v908 = vsub.f32 %v844, %v876
        %v909 = vsub.f32 %v845, %v877
        %v910 = vsub.f32 %v846, %v878
        %v911 = vsub.f32 %v847, %v879
        %v912 = vsub.f32 %v848, %v880
        %v913 = vsub.f32 %v849, %v881
        %v914 = vsub.f32 %v850, %v882
        %v915 = vsub.f32 %v851, %v883
        %v916 = vsub.f32 %v852, %v884
        %v917 = vsub.f32 %v853, %v885
        %v918 = vsub.f32 %v854, %v886
        %v919 = vsub.f32 %v855, %v887
        %v920 = vadd.f32 %v408, %v536
        %v921 = vadd.f32 %v409, %v537
        %v922 = vadd.f32 %v410, %v538
        %v923 = vadd.f32 %v411, %v539
        %v924 = vadd.f32 %v412, %v540
        %v925 = vadd.f32 %v413, %v541
        %v926 = vadd.f32 %v414, %v542
        %v927 = vadd.f32 %v415, %v543
        %v928 = vadd.f32 %v416, %v544
        %v929 = vadd.f32 %v417, %v545
        %v930 = vadd.f32 %v418, %v546
        %v931 = vadd.f32 %v419, %v547
        %v932 = vadd.f32 %v420, %v548
        %v933 = vadd.f32 %v421, %v549
        %v934 = vadd.f32 %v422, %v550
        %v935 = vadd.f32 %v423, %v551
        %v936 = vadd.f32 %v424, %v552
        %v937 = vadd.f32 %v425, %v553
        %v938 = vadd.f32 %v426, %v554
        %v939 = vadd.f32 %v427, %v555
        %v940 = vadd.f32 %v428, %v556
        %v941 = vadd.f32 %v429, %v557
        %v942 = vadd.f32 %v430, %v558
        %v943 = vadd.f32 %v431, %v559
        %v944 = vadd.f32 %v432, %v560
        %v945 = vadd.f32 %v433, %v561
        %v946 = vadd.f32 %v434, %v562
        %v947 = vadd.f32 %v435, %v563
        %v948 = vadd.f32 %v436, %v564
        %v949 = vadd.f32 %v437, %v565
        %v950 = vadd.f32 %v438, %v566
        %v951 = vadd.f32 %v439, %v567
        %v952 = vmul.f32 %v920, %v920
        %v953 = vmul.f32 %v921, %v921
        %v954 = vmul.f32 %v922, %v922
        %v955 = vmul.f32 %v923, %v923
        %v956 = vmul.f32 %v924, %v924
        %v957 = vmul.f32 %v925, %v925
        %v958 = vmul.f32 %v926, %v926
        %v959 = vmul.f32 %v927, %v927
        %v960 = vmul.f32 %v928, %v928
        %v961 = vmul.f32 %v929, %v929
        %v962 = vmul.f32 %v930, %v930
        %v963 = vmul.f32 %v931, %v931
        %v964 = vmul.f32 %v932, %v932
        %v965 = vmul.f32 %v933, %v933
        %v966 = vmul.f32 %v934, %v934
        %v967 = vmul.f32 %v935, %v935
        %v968 = vmul.f32 %v936, %v936
        %v969 = vmul.f32 %v937, %v937
        %v970 = vmul.f32 %v938, %v938
        %v971 = vmul.f32 %v939, %v939
        %v972 = vmul.f32 %v940, %v940
        %v973 = vmul.f32 %v941, %v941
        %v974 = vmul.f32 %v942, %v942
        %v975 = vmul.f32 %v943, %v943
        %v976 = vmul.f32 %v944, %v944
        %v977 = vmul.f32 %v945, %v945
        %v978 = vmul.f32 %v946, %v946
        %v979 = vmul.f32 %v947, %v947
        %v980 = vmul.f32 %v948, %v948
        %v981 = vmul.f32 %v949, %v949
        %v982 = vmul.f32 %v950, %v950
        %v983 = vmul.f32 %v951, %v951
        %v984 = vmul.f32 %v888, 7.2
        %v985 = vmul.f32 %v889, 7.2
        %v986 = vmul.f32 %v890, 7.2
        %v987 = vmul.f32 %v891, 7.2
        %v988 = vmul.f32 %v892, 7.2
        %v989 = vmul.f32 %v893, 7.2
        %v990 = vmul.f32 %v894, 7.2
        %v991 = vmul.f32 %v895, 7.2
        %v992 = vmul.f32 %v896, 7.2
        %v993 = vmul.f32 %v897, 7.2
        %v994 = vmul.f32 %v898, 7.2
        %v995 = vmul.f32 %v899, 7.2
        %v996 = vmul.f32 %v900, 7.2
        %v997 = vmul.f32 %v901, 7.2
        %v998 = vmul.f32 %v902, 7.2
        %v999 = vmul.f32 %v903, 7.2
        %v1000 = vmul.f32 %v904, 7.2
        %v1001 = vmul.f32 %v905, 7.2
        %v1002 = vmul.f32 %v906, 7.2
        %v1003 = vmul.f32 %v907, 7.2
        %v1004 = vmul.f32 %v908, 7.2
        %v1005 = vmul.f32 %v909, 7.2
        %v1006 = vmul.f32 %v910, 7.2
        %v1007 = vmul.f32 %v911, 7.2
        %v1008 = vmul.f32 %v912, 7.2
        %v1009 = vmul.f32 %v913, 7.2
        %v1010 = vmul.f32 %v914, 7.2
        %v1011 = vmul.f32 %v915, 7.2
        %v1012 = vmul.f32 %v916, 7.2
        %v1013 = vmul.f32 %v917, 7.2
        %v1014 = vmul.f32 %v918, 7.2
        %v1015 = vmul.f32 %v919, 7.2
        %vm1016 = vcmp.le.f32.partialorder %v952, %v984
        %vm1017 = vcmp.le.f32.partialorder %v953, %v985
        %vm1018 = vcmp.le.f32.partialorder %v954, %v986
        %vm1019 = vcmp.le.f32.partialorder %v955, %v987
        %vm1020 = vcmp.le.f32.partialorder %v956, %v988
        %vm1021 = vcmp.le.f32.partialorder %v957, %v989
        %vm1022 = vcmp.le.f32.partialorder %v958, %v990
        %vm1023 = vcmp.le.f32.partialorder %v959, %v991
        %vm1024 = vcmp.le.f32.partialorder %v960, %v992
        %vm1025 = vcmp.le.f32.partialorder %v961, %v993
        %vm1026 = vcmp.le.f32.partialorder %v962, %v994
        %vm1027 = vcmp.le.f32.partialorder %v963, %v995
        %vm1028 = vcmp.le.f32.partialorder %v964, %v996
        %vm1029 = vcmp.le.f32.partialorder %v965, %v997
        %vm1030 = vcmp.le.f32.partialorder %v966, %v998
        %vm1031 = vcmp.le.f32.partialorder %v967, %v999
        %vm1032 = vcmp.le.f32.partialorder %v968, %v1000
        %vm1033 = vcmp.le.f32.partialorder %v969, %v1001
        %vm1034 = vcmp.le.f32.partialorder %v970, %v1002
        %vm1035 = vcmp.le.f32.partialorder %v971, %v1003
        %vm1036 = vcmp.le.f32.partialorder %v972, %v1004
        %vm1037 = vcmp.le.f32.partialorder %v973, %v1005
        %vm1038 = vcmp.le.f32.partialorder %v974, %v1006
        %vm1039 = vcmp.le.f32.partialorder %v975, %v1007
        %vm1040 = vcmp.le.f32.partialorder %v976, %v1008
        %vm1041 = vcmp.le.f32.partialorder %v977, %v1009
        %vm1042 = vcmp.le.f32.partialorder %v978, %v1010
        %vm1043 = vcmp.le.f32.partialorder %v979, %v1011
        %vm1044 = vcmp.le.f32.partialorder %v980, %v1012
        %vm1045 = vcmp.le.f32.partialorder %v981, %v1013
        %vm1046 = vcmp.le.f32.partialorder %v982, %v1014
        %vm1047 = vcmp.le.f32.partialorder %v983, %v1015
        %vm1048 = vcmp.gt.f32.partialorder %v888, 0.0
        %vm1049 = vcmp.gt.f32.partialorder %v889, 0.0
        %vm1050 = vcmp.gt.f32.partialorder %v890, 0.0
        %vm1051 = vcmp.gt.f32.partialorder %v891, 0.0
        %vm1052 = vcmp.gt.f32.partialorder %v892, 0.0
        %vm1053 = vcmp.gt.f32.partialorder %v893, 0.0
        %vm1054 = vcmp.gt.f32.partialorder %v894, 0.0
        %vm1055 = vcmp.gt.f32.partialorder %v895, 0.0
        %vm1056 = vcmp.gt.f32.partialorder %v896, 0.0
        %vm1057 = vcmp.gt.f32.partialorder %v897, 0.0
        %vm1058 = vcmp.gt.f32.partialorder %v898, 0.0
        %vm1059 = vcmp.gt.f32.partialorder %v899, 0.0
        %vm1060 = vcmp.gt.f32.partialorder %v900, 0.0
        %vm1061 = vcmp.gt.f32.partialorder %v901, 0.0
        %vm1062 = vcmp.gt.f32.partialorder %v902, 0.0
        %vm1063 = vcmp.gt.f32.partialorder %v903, 0.0
        %vm1064 = vcmp.gt.f32.partialorder %v904, 0.0
        %vm1065 = vcmp.gt.f32.partialorder %v905, 0.0
        %vm1066 = vcmp.gt.f32.partialorder %v906, 0.0
        %vm1067 = vcmp.gt.f32.partialorder %v907, 0.0
        %vm1068 = vcmp.gt.f32.partialorder %v908, 0.0
        %vm1069 = vcmp.gt.f32.partialorder %v909, 0.0
        %vm1070 = vcmp.gt.f32.partialorder %v910, 0.0
        %vm1071 = vcmp.gt.f32.partialorder %v911, 0.0
        %vm1072 = vcmp.gt.f32.partialorder %v912, 0.0
        %vm1073 = vcmp.gt.f32.partialorder %v913, 0.0
        %vm1074 = vcmp.gt.f32.partialorder %v914, 0.0
        %vm1075 = vcmp.gt.f32.partialorder %v915, 0.0
        %vm1076 = vcmp.gt.f32.partialorder %v916, 0.0
        %vm1077 = vcmp.gt.f32.partialorder %v917, 0.0
        %vm1078 = vcmp.gt.f32.partialorder %v918, 0.0
        %vm1079 = vcmp.gt.f32.partialorder %v919, 0.0
        %vm1080 = vmand %vm1016, %vm1048
        %vm1081 = vmand %vm1017, %vm1049
        %vm1082 = vmand %vm1018, %vm1050
        %vm1083 = vmand %vm1019, %vm1051
        %vm1084 = vmand %vm1020, %vm1052
        %vm1085 = vmand %vm1021, %vm1053
        %vm1086 = vmand %vm1022, %vm1054
        %vm1087 = vmand %vm1023, %vm1055
        %vm1088 = vmand %vm1024, %vm1056
        %vm1089 = vmand %vm1025, %vm1057
        %vm1090 = vmand %vm1026, %vm1058
        %vm1091 = vmand %vm1027, %vm1059
        %vm1092 = vmand %vm1028, %vm1060
        %vm1093 = vmand %vm1029, %vm1061
        %vm1094 = vmand %vm1030, %vm1062
        %vm1095 = vmand %vm1031, %vm1063
        %vm1096 = vmand %vm1032, %vm1064
        %vm1097 = vmand %vm1033, %vm1065
        %vm1098 = vmand %vm1034, %vm1066
        %vm1099 = vmand %vm1035, %vm1067
        %vm1100 = vmand %vm1036, %vm1068
        %vm1101 = vmand %vm1037, %vm1069
        %vm1102 = vmand %vm1038, %vm1070
        %vm1103 = vmand %vm1039, %vm1071
        %vm1104 = vmand %vm1040, %vm1072
        %vm1105 = vmand %vm1041, %vm1073
        %vm1106 = vmand %vm1042, %vm1074
        %vm1107 = vmand %vm1043, %vm1075
        %vm1108 = vmand %vm1044, %vm1076
        %vm1109 = vmand %vm1045, %vm1077
        %vm1110 = vmand %vm1046, %vm1078
        %vm1111 = vmand %vm1047, %vm1079
        %1112 = vmax.xlane.f32.xlu0 %v139
        %v1113 = vpop.xlane.xlu0 %1112
        %1114 = vmax.xlane.f32.xlu0 %v140
        %v1115 = vpop.xlane.xlu0 %1114
        %1116 = vmax.xlane.f32.xlu0 %v141
        %v1117 = vpop.xlane.xlu0 %1116
        %1118 = vmax.xlane.f32.xlu0 %v142
        %v1119 = vpop.xlane.xlu0 %1118
        %1120 = vmax.xlane.f32.xlu0 %v143
        %v1121 = vpop.xlane.xlu0 %1120
        %1122 = vmax.xlane.f32.xlu0 %v144
        %v1123 = vpop.xlane.xlu0 %1122
        %1124 = vmax.xlane.f32.xlu0 %v145
        %v1125 = vpop.xlane.xlu0 %1124
        %1126 = vmax.xlane.f32.xlu0 %v146
        %v1127 = vpop.xlane.xlu0 %1126
        %1128 = vmax.xlane.f32.xlu0 %v147
        %v1129 = vpop.xlane.xlu0 %1128
        %1130 = vmax.xlane.f32.xlu0 %v148
        %v1131 = vpop.xlane.xlu0 %1130
        %1132 = vmax.xlane.f32.xlu0 %v149
        %v1133 = vpop.xlane.xlu0 %1132
        %1134 = vmax.xlane.f32.xlu0 %v150
        %v1135 = vpop.xlane.xlu0 %1134
        %1136 = vmax.xlane.f32.xlu0 %v151
        %v1137 = vpop.xlane.xlu0 %1136
        %1138 = vmax.xlane.f32.xlu0 %v152
        %v1139 = vpop.xlane.xlu0 %1138
        %1140 = vmax.xlane.f32.xlu0 %v153
        %v1141 = vpop.xlane.xlu0 %1140
        %1142 = vmax.xlane.f32.xlu0 %v154
        %v1143 = vpop.xlane.xlu0 %1142
        %1144 = vmax.xlane.f32.xlu0 %v155
        %v1145 = vpop.xlane.xlu0 %1144
        %1146 = vmax.xlane.f32.xlu0 %v156
        %v1147 = vpop.xlane.xlu0 %1146
        %1148 = vmax.xlane.f32.xlu0 %v157
        %v1149 = vpop.xlane.xlu0 %1148
        %1150 = vmax.xlane.f32.xlu0 %v158
        %v1151 = vpop.xlane.xlu0 %1150
        %1152 = vmax.xlane.f32.xlu0 %v159
        %v1153 = vpop.xlane.xlu0 %1152
        %1154 = vmax.xlane.f32.xlu0 %v160
        %v1155 = vpop.xlane.xlu0 %1154
        %1156 = vmax.xlane.f32.xlu0 %v161
        %v1157 = vpop.xlane.xlu0 %1156
        %1158 = vmax.xlane.f32.xlu0 %v162
        %v1159 = vpop.xlane.xlu0 %1158
        %1160 = vmax.xlane.f32.xlu0 %v163
        %v1161 = vpop.xlane.xlu0 %1160
        %1162 = vmax.xlane.f32.xlu0 %v164
        %v1163 = vpop.xlane.xlu0 %1162
        %1164 = vmax.xlane.f32.xlu0 %v165
        %v1165 = vpop.xlane.xlu0 %1164
        %1166 = vmax.xlane.f32.xlu0 %v166
        %v1167 = vpop.xlane.xlu0 %1166
        %1168 = vmax.xlane.f32.xlu0 %v167
        %v1169 = vpop.xlane.xlu0 %1168
        %1170 = vmax.xlane.f32.xlu0 %v168
        %v1171 = vpop.xlane.xlu0 %1170
        %1172 = vmax.xlane.f32.xlu0 %v169
        %v1173 = vpop.xlane.xlu0 %1172
        %1174 = vmax.xlane.f32.xlu0 %v170
        %v1175 = vpop.xlane.xlu0 %1174
        %vm1176 = vcmp.eq.f32.partialorder %v139, %v1113
        %vm1177 = vcmp.eq.f32.partialorder %v140, %v1115
        %vm1178 = vcmp.eq.f32.partialorder %v141, %v1117
        %vm1179 = vcmp.eq.f32.partialorder %v142, %v1119
        %vm1180 = vcmp.eq.f32.partialorder %v143, %v1121
        %vm1181 = vcmp.eq.f32.partialorder %v144, %v1123
        %vm1182 = vcmp.eq.f32.partialorder %v145, %v1125
        %vm1183 = vcmp.eq.f32.partialorder %v146, %v1127
        %vm1184 = vcmp.eq.f32.partialorder %v147, %v1129
        %vm1185 = vcmp.eq.f32.partialorder %v148, %v1131
        %vm1186 = vcmp.eq.f32.partialorder %v149, %v1133
        %vm1187 = vcmp.eq.f32.partialorder %v150, %v1135
        %vm1188 = vcmp.eq.f32.partialorder %v151, %v1137
        %vm1189 = vcmp.eq.f32.partialorder %v152, %v1139
        %vm1190 = vcmp.eq.f32.partialorder %v153, %v1141
        %vm1191 = vcmp.eq.f32.partialorder %v154, %v1143
        %vm1192 = vcmp.eq.f32.partialorder %v155, %v1145
        %vm1193 = vcmp.eq.f32.partialorder %v156, %v1147
        %vm1194 = vcmp.eq.f32.partialorder %v157, %v1149
        %vm1195 = vcmp.eq.f32.partialorder %v158, %v1151
        %vm1196 = vcmp.eq.f32.partialorder %v159, %v1153
        %vm1197 = vcmp.eq.f32.partialorder %v160, %v1155
        %vm1198 = vcmp.eq.f32.partialorder %v161, %v1157
        %vm1199 = vcmp.eq.f32.partialorder %v162, %v1159
        %vm1200 = vcmp.eq.f32.partialorder %v163, %v1161
        %vm1201 = vcmp.eq.f32.partialorder %v164, %v1163
        %vm1202 = vcmp.eq.f32.partialorder %v165, %v1165
        %vm1203 = vcmp.eq.f32.partialorder %v166, %v1167
        %vm1204 = vcmp.eq.f32.partialorder %v167, %v1169
        %vm1205 = vcmp.eq.f32.partialorder %v168, %v1171
        %vm1206 = vcmp.eq.f32.partialorder %v169, %v1173
        %vm1207 = vcmp.eq.f32.partialorder %v170, %v1175
        %1208 = vst [vmem:[#allocation2] sm:$0xff] -inf
        %1209 = vst [vmem:[#allocation2 + $0x8] sm:$0xff] -inf
        %1210 = vst [vmem:[#allocation2 + $0x10] sm:$0x3] -inf
        %1211 = vst [vmem:[%s174] sm:$0xff] -inf
        %1212 = vst [vmem:[%s174 + $0x8] sm:$0xff] -inf
        %1213 = vst [vmem:[%s174 + $0x10] sm:$0x3] -inf
        %1214 = vst [vmem:[#allocation2] sm:$0x1] -inf
        %1215 = vst [vmem:[#allocation2 + $0x18] sm:$0x1] -inf
        %1216 = vst [vmem:[#allocation2 + $0x30] sm:$0x1] -inf
        %1217 = vst [vmem:[#allocation2 + $0x48] sm:$0x1] -inf
        %1218 = vst [vmem:[#allocation2 + $0x60] sm:$0x1] -inf
        %1219 = vst [vmem:[#allocation2 + $0x78] sm:$0x1] -inf
        %1220 = vst [vmem:[#allocation2 + $0x90] sm:$0x1] -inf
        %1221 = vst [vmem:[#allocation2 + $0xa8] sm:$0x1] -inf
        %1222 = vst [vmem:[#allocation2 + $0xc0] sm:$0x1] -inf
        %1223 = vst [vmem:[#allocation2 + $0xd8] sm:$0x1] -inf
        %1224 = vst [vmem:[#allocation2 + $0xf0] sm:$0x1] -inf
        %1225 = vst [vmem:[#allocation2 + $0x108] sm:$0x1] -inf
        %1226 = vst [vmem:[#allocation2 + $0x120] sm:$0x1] -inf
        %1227 = vst [vmem:[#allocation2 + $0x138] sm:$0x1] -inf
        %1228 = vst [vmem:[#allocation2 + $0x150] sm:$0x1] -inf
        %1229 = vst [vmem:[#allocation2 + $0x168] sm:$0x1] -inf
        %1230 = vst [vmem:[#allocation2 + $0x180] sm:$0x1] -inf
        %1231 = vst [vmem:[#allocation2 + $0x198] sm:$0x1] -inf
        %1232 = vst [vmem:[#allocation2 + $0x11] sm:$0x1] -inf
        %1233 = vst [vmem:[#allocation2 + $0x29] sm:$0x1] -inf
        %1234 = vst [vmem:[#allocation2 + $0x41] sm:$0x1] -inf
        %1235 = vst [vmem:[#allocation2 + $0x59] sm:$0x1] -inf
        %1236 = vst [vmem:[#allocation2 + $0x71] sm:$0x1] -inf
        %1237 = vst [vmem:[#allocation2 + $0x89] sm:$0x1] -inf
        %1238 = vst [vmem:[#allocation2 + $0xa1] sm:$0x1] -inf
        %1239 = vst [vmem:[#allocation2 + $0xb9] sm:$0x1] -inf
        %1240 = vst [vmem:[#allocation2 + $0xd1] sm:$0x1] -inf
        %1241 = vst [vmem:[#allocation2 + $0xe9] sm:$0x1] -inf
        %1242 = vst [vmem:[#allocation2 + $0x101] sm:$0x1] -inf
        %1243 = vst [vmem:[#allocation2 + $0x119] sm:$0x1] -inf
        %1244 = vst [vmem:[#allocation2 + $0x131] sm:$0x1] -inf
        %1245 = vst [vmem:[#allocation2 + $0x149] sm:$0x1] -inf
        %1246 = vst [vmem:[#allocation2 + $0x161] sm:$0x1] -inf
        %1247 = vst [vmem:[#allocation2 + $0x179] sm:$0x1] -inf
        %1248 = vst [vmem:[#allocation2 + $0x191] sm:$0x1] -inf
        %1249 = vst [vmem:[#allocation2 + $0x1a9] sm:$0x1] -inf
        %v1250 = vld [vmem:[#allocation2] sm:$0xff]
        %v1251 = vld [vmem:[#allocation2 + $0x8] sm:$0xff]
        %v1252 = vld [vmem:[#allocation2 + $0x10] sm:$0x3]
        %v1253 = vld [vmem:[#allocation2 + $0x18] sm:$0xff]
        %v1254 = vld [vmem:[#allocation2 + $0x20] sm:$0xff]
        %v1255 = vld [vmem:[#allocation2 + $0x28] sm:$0x3]
        %v1256 = vld [vmem:[#allocation2 + $0x30] sm:$0xff]
        %v1257 = vld [vmem:[#allocation2 + $0x38] sm:$0xff]
        %v1258 = vld [vmem:[#allocation2 + $0x40] sm:$0x3]
        %v1259 = vld [vmem:[#allocation2 + $0x48] sm:$0xff]
        %v1260 = vld [vmem:[#allocation2 + $0x50] sm:$0xff]
        %v1261 = vld [vmem:[#allocation2 + $0x58] sm:$0x3]
        %v1262 = vld [vmem:[#allocation2 + $0x60] sm:$0xff]
        %v1263 = vld [vmem:[#allocation2 + $0x68] sm:$0xff]
        %v1264 = vld [vmem:[#allocation2 + $0x70] sm:$0x3]
        %v1265 = vld [vmem:[#allocation2 + $0x78] sm:$0xff]
        %v1266 = vld [vmem:[#allocation2 + $0x80] sm:$0xff]
        %v1267 = vld [vmem:[#allocation2 + $0x88] sm:$0x3]
        %v1268 = vld [vmem:[#allocation2 + $0x90] sm:$0xff]
        %v1269 = vld [vmem:[#allocation2 + $0x98] sm:$0xff]
        %v1270 = vld [vmem:[#allocation2 + $0xa0] sm:$0x3]
        %v1271 = vld [vmem:[#allocation2 + $0xa8] sm:$0xff]
        %v1272 = vld [vmem:[#allocation2 + $0xb0] sm:$0xff]
        %v1273 = vld [vmem:[#allocation2 + $0xb8] sm:$0x3]
        %v1274 = vld [vmem:[#allocation2 + $0xc0] sm:$0xff]
        %v1275 = vld [vmem:[#allocation2 + $0xc8] sm:$0xff]
        %v1276 = vld [vmem:[#allocation2 + $0xd0] sm:$0x3]
        %v1277 = vld [vmem:[#allocation2 + $0xd8] sm:$0xff]
        %v1278 = vld [vmem:[#allocation2 + $0xe0] sm:$0xff]
        %v1279 = vld [vmem:[#allocation2 + $0xe8] sm:$0x3]
        %v1280 = vld [vmem:[#allocation2 + $0xf0] sm:$0xff]
        %v1281 = vld [vmem:[#allocation2 + $0xf8] sm:$0xff]
        %v1282 = vld [vmem:[#allocation2 + $0x100] sm:$0x3]
        %v1283 = vld [vmem:[#allocation2 + $0x108] sm:$0xff]
        %v1284 = vld [vmem:[#allocation2 + $0x110] sm:$0xff]
        %v1285 = vld [vmem:[#allocation2 + $0x118] sm:$0x3]
        %v1286 = vld [vmem:[#allocation2 + $0x120] sm:$0xff]
        %v1287 = vld [vmem:[#allocation2 + $0x128] sm:$0xff]
        %v1288 = vld [vmem:[#allocation2 + $0x130] sm:$0x3]
        %v1289 = vld [vmem:[#allocation2 + $0x138] sm:$0xff]
        %v1290 = vld [vmem:[#allocation2 + $0x140] sm:$0xff]
        %v1291 = vld [vmem:[#allocation2 + $0x148] sm:$0x3]
        %v1292 = vld [vmem:[#allocation2 + $0x150] sm:$0xff]
        %v1293 = vld [vmem:[#allocation2 + $0x158] sm:$0xff]
        %v1294 = vld [vmem:[#allocation2 + $0x160] sm:$0x3]
        %v1295 = vld [vmem:[#allocation2 + $0x168] sm:$0xff]
        %v1296 = vld [vmem:[#allocation2 + $0x170] sm:$0xff]
        %v1297 = vld [vmem:[#allocation2 + $0x178] sm:$0x3]
        %v1298 = vld [vmem:[%s214] sm:$0xff]
        %v1299 = vld [vmem:[%s214 + $0x8] sm:$0xff]
        %v1300 = vld [vmem:[%s214 + $0x10] sm:$0x3]
        %v1301 = vld [vmem:[%s214 + $0x18] sm:$0xff]
        %v1302 = vld [vmem:[%s214 + $0x20] sm:$0xff]
        %v1303 = vld [vmem:[%s214 + $0x28] sm:$0x3]
        %v1304 = vld [vmem:[%s214 + $0x30] sm:$0xff]
        %v1305 = vld [vmem:[%s214 + $0x38] sm:$0xff]
        %v1306 = vld [vmem:[%s214 + $0x40] sm:$0x3]
        %v1307 = vld [vmem:[%s214 + $0x48] sm:$0xff]
        %v1308 = vld [vmem:[%s214 + $0x50] sm:$0xff]
        %v1309 = vld [vmem:[%s214 + $0x58] sm:$0x3]
        %v1310 = vld [vmem:[%s214 + $0x60] sm:$0xff]
        %v1311 = vld [vmem:[%s214 + $0x68] sm:$0xff]
        %v1312 = vld [vmem:[%s214 + $0x70] sm:$0x3]
        %v1313 = vld [vmem:[%s214 + $0x78] sm:$0xff]
        %v1314 = vld [vmem:[%s214 + $0x80] sm:$0xff]
        %v1315 = vld [vmem:[%s214 + $0x88] sm:$0x3]
        %v1316 = vld [vmem:[%s214 + $0x90] sm:$0xff]
        %v1317 = vld [vmem:[%s214 + $0x98] sm:$0xff]
        %v1318 = vld [vmem:[%s214 + $0xa0] sm:$0x3]
        %v1319 = vld [vmem:[%s214 + $0xa8] sm:$0xff]
        %v1320 = vld [vmem:[%s214 + $0xb0] sm:$0xff]
        %v1321 = vld [vmem:[%s214 + $0xb8] sm:$0x3]
        %v1322 = vld [vmem:[%s214 + $0xc0] sm:$0xff]
        %v1323 = vld [vmem:[%s214 + $0xc8] sm:$0xff]
        %v1324 = vld [vmem:[%s214 + $0xd0] sm:$0x3]
        %v1325 = vld [vmem:[%s214 + $0xd8] sm:$0xff]
        %v1326 = vld [vmem:[%s214 + $0xe0] sm:$0xff]
        %v1327 = vld [vmem:[%s214 + $0xe8] sm:$0x3]
        %v1328 = vld [vmem:[%s214 + $0xf0] sm:$0xff]
        %v1329 = vld [vmem:[%s214 + $0xf8] sm:$0xff]
        %v1330 = vld [vmem:[%s214 + $0x100] sm:$0x3]
        %v1331 = vld [vmem:[%s214 + $0x108] sm:$0xff]
        %v1332 = vld [vmem:[%s214 + $0x110] sm:$0xff]
        %v1333 = vld [vmem:[%s214 + $0x118] sm:$0x3]
        %v1334 = vld [vmem:[%s214 + $0x120] sm:$0xff]
        %v1335 = vld [vmem:[%s214 + $0x128] sm:$0xff]
        %v1336 = vld [vmem:[%s214 + $0x130] sm:$0x3]
        %v1337 = vld [vmem:[%s214 + $0x138] sm:$0xff]
        %v1338 = vld [vmem:[%s214 + $0x140] sm:$0xff]
        %v1339 = vld [vmem:[%s214 + $0x148] sm:$0x3]
        %v1340 = vld [vmem:[%s214 + $0x150] sm:$0xff]
        %v1341 = vld [vmem:[%s214 + $0x158] sm:$0xff]
        %v1342 = vld [vmem:[%s214 + $0x160] sm:$0x3]
        %v1343 = vld [vmem:[%s214 + $0x168] sm:$0xff]
        %v1344 = vld [vmem:[%s214 + $0x170] sm:$0xff]
        %v1345 = vld [vmem:[%s214 + $0x178] sm:$0x3]
        %v1346 = vmax.f32 %v1250, %v1298
        %v1347 = vmax.f32 %v1251, %v1299
        %v1348 = vmax.f32 %v1252, %v1300
        %v1349 = vmax.f32 %v1253, %v1301
        %v1350 = vmax.f32 %v1254, %v1302
        %v1351 = vmax.f32 %v1255, %v1303
        %v1352 = vmax.f32 %v1256, %v1304
        %v1353 = vmax.f32 %v1257, %v1305
        %v1354 = vmax.f32 %v1258, %v1306
        %v1355 = vmax.f32 %v1259, %v1307
        %v1356 = vmax.f32 %v1260, %v1308
        %v1357 = vmax.f32 %v1261, %v1309
        %v1358 = vmax.f32 %v1262, %v1310
        %v1359 = vmax.f32 %v1263, %v1311
        %v1360 = vmax.f32 %v1264, %v1312
        %v1361 = vmax.f32 %v1265, %v1313
        %v1362 = vmax.f32 %v1266, %v1314
        %v1363 = vmax.f32 %v1267, %v1315
        %v1364 = vmax.f32 %v1268, %v1316
        %v1365 = vmax.f32 %v1269, %v1317
        %v1366 = vmax.f32 %v1270, %v1318
        %v1367 = vmax.f32 %v1271, %v1319
        %v1368 = vmax.f32 %v1272, %v1320
        %v1369 = vmax.f32 %v1273, %v1321
        %v1370 = vmax.f32 %v1274, %v1322
        %v1371 = vmax.f32 %v1275, %v1323
        %v1372 = vmax.f32 %v1276, %v1324
        %v1373 = vmax.f32 %v1277, %v1325
        %v1374 = vmax.f32 %v1278, %v1326
        %v1375 = vmax.f32 %v1279, %v1327
        %v1376 = vmax.f32 %v1280, %v1328
        %v1377 = vmax.f32 %v1281, %v1329
        %v1378 = vmax.f32 %v1282, %v1330
        %v1379 = vmax.f32 %v1283, %v1331
        %v1380 = vmax.f32 %v1284, %v1332
        %v1381 = vmax.f32 %v1285, %v1333
        %v1382 = vmax.f32 %v1286, %v1334
        %v1383 = vmax.f32 %v1287, %v1335
        %v1384 = vmax.f32 %v1288, %v1336
        %v1385 = vmax.f32 %v1289, %v1337
        %v1386 = vmax.f32 %v1290, %v1338
        %v1387 = vmax.f32 %v1291, %v1339
        %v1388 = vmax.f32 %v1292, %v1340
        %v1389 = vmax.f32 %v1293, %v1341
        %v1390 = vmax.f32 %v1294, %v1342
        %v1391 = vmax.f32 %v1295, %v1343
        %v1392 = vmax.f32 %v1296, %v1344
        %v1393 = vmax.f32 %v1297, %v1345
        %v1394 = vld [vmem:[%s375] sm:$0xff]
        %v1395 = vld [vmem:[%s375 + $0x8] sm:$0xff]
        %v1396 = vld [vmem:[%s375 + $0x10] sm:$0x3]
        %v1397 = vld [vmem:[%s375 + $0x18] sm:$0xff]
        %v1398 = vld [vmem:[%s375 + $0x20] sm:$0xff]
        %v1399 = vld [vmem:[%s375 + $0x28] sm:$0x3]
        %v1400 = vld [vmem:[%s375 + $0x30] sm:$0xff]
        %v1401 = vld [vmem:[%s375 + $0x38] sm:$0xff]
        %v1402 = vld [vmem:[%s375 + $0x40] sm:$0x3]
        %v1403 = vld [vmem:[%s375 + $0x48] sm:$0xff]
        %v1404 = vld [vmem:[%s375 + $0x50] sm:$0xff]
        %v1405 = vld [vmem:[%s375 + $0x58] sm:$0x3]
        %v1406 = vld [vmem:[%s375 + $0x60] sm:$0xff]
        %v1407 = vld [vmem:[%s375 + $0x68] sm:$0xff]
        %v1408 = vld [vmem:[%s375 + $0x70] sm:$0x3]
        %v1409 = vld [vmem:[%s375 + $0x78] sm:$0xff]
        %v1410 = vld [vmem:[%s375 + $0x80] sm:$0xff]
        %v1411 = vld [vmem:[%s375 + $0x88] sm:$0x3]
        %v1412 = vld [vmem:[%s375 + $0x90] sm:$0xff]
        %v1413 = vld [vmem:[%s375 + $0x98] sm:$0xff]
        %v1414 = vld [vmem:[%s375 + $0xa0] sm:$0x3]
        %v1415 = vld [vmem:[%s375 + $0xa8] sm:$0xff]
        %v1416 = vld [vmem:[%s375 + $0xb0] sm:$0xff]
        %v1417 = vld [vmem:[%s375 + $0xb8] sm:$0x3]
        %v1418 = vld [vmem:[%s375 + $0xc0] sm:$0xff]
        %v1419 = vld [vmem:[%s375 + $0xc8] sm:$0xff]
        %v1420 = vld [vmem:[%s375 + $0xd0] sm:$0x3]
        %v1421 = vld [vmem:[%s375 + $0xd8] sm:$0xff]
        %v1422 = vld [vmem:[%s375 + $0xe0] sm:$0xff]
        %v1423 = vld [vmem:[%s375 + $0xe8] sm:$0x3]
        %v1424 = vld [vmem:[%s375 + $0xf0] sm:$0xff]
        %v1425 = vld [vmem:[%s375 + $0xf8] sm:$0xff]
        %v1426 = vld [vmem:[%s375 + $0x100] sm:$0x3]
        %v1427 = vld [vmem:[%s375 + $0x108] sm:$0xff]
        %v1428 = vld [vmem:[%s375 + $0x110] sm:$0xff]
        %v1429 = vld [vmem:[%s375 + $0x118] sm:$0x3]
        %v1430 = vld [vmem:[%s375 + $0x120] sm:$0xff]
        %v1431 = vld [vmem:[%s375 + $0x128] sm:$0xff]
        %v1432 = vld [vmem:[%s375 + $0x130] sm:$0x3]
        %v1433 = vld [vmem:[%s375 + $0x138] sm:$0xff]
        %v1434 = vld [vmem:[%s375 + $0x140] sm:$0xff]
        %v1435 = vld [vmem:[%s375 + $0x148] sm:$0x3]
        %v1436 = vld [vmem:[%s375 + $0x150] sm:$0xff]
        %v1437 = vld [vmem:[%s375 + $0x158] sm:$0xff]
        %v1438 = vld [vmem:[%s375 + $0x160] sm:$0x3]
        %v1439 = vld [vmem:[%s375 + $0x168] sm:$0xff]
        %v1440 = vld [vmem:[%s375 + $0x170] sm:$0xff]
        %v1441 = vld [vmem:[%s375 + $0x178] sm:$0x3]
        %v1442 = vmax.f32 %v1346, %v1394
        %v1443 = vmax.f32 %v1347, %v1395
        %v1444 = vmax.f32 %v1348, %v1396
        %v1445 = vmax.f32 %v1349, %v1397
        %v1446 = vmax.f32 %v1350, %v1398
        %v1447 = vmax.f32 %v1351, %v1399
        %v1448 = vmax.f32 %v1352, %v1400
        %v1449 = vmax.f32 %v1353, %v1401
        %v1450 = vmax.f32 %v1354, %v1402
        %v1451 = vmax.f32 %v1355, %v1403
        %v1452 = vmax.f32 %v1356, %v1404
        %v1453 = vmax.f32 %v1357, %v1405
        %v1454 = vmax.f32 %v1358, %v1406
        %v1455 = vmax.f32 %v1359, %v1407
        %v1456 = vmax.f32 %v1360, %v1408
        %v1457 = vmax.f32 %v1361, %v1409
        %v1458 = vmax.f32 %v1362, %v1410
        %v1459 = vmax.f32 %v1363, %v1411
        %v1460 = vmax.f32 %v1364, %v1412
        %v1461 = vmax.f32 %v1365, %v1413
        %v1462 = vmax.f32 %v1366, %v1414
        %v1463 = vmax.f32 %v1367, %v1415
        %v1464 = vmax.f32 %v1368, %v1416
        %v1465 = vmax.f32 %v1369, %v1417
        %v1466 = vmax.f32 %v1370, %v1418
        %v1467 = vmax.f32 %v1371, %v1419
        %v1468 = vmax.f32 %v1372, %v1420
        %v1469 = vmax.f32 %v1373, %v1421
        %v1470 = vmax.f32 %v1374, %v1422
        %v1471 = vmax.f32 %v1375, %v1423
        %v1472 = vmax.f32 %v1376, %v1424
        %v1473 = vmax.f32 %v1377, %v1425
        %v1474 = vmax.f32 %v1378, %v1426
        %v1475 = vmax.f32 %v1379, %v1427
        %v1476 = vmax.f32 %v1380, %v1428
        %v1477 = vmax.f32 %v1381, %v1429
        %v1478 = vmax.f32 %v1382, %v1430
        %v1479 = vmax.f32 %v1383, %v1431
        %v1480 = vmax.f32 %v1384, %v1432
        %v1481 = vmax.f32 %v1385, %v1433
        %v1482 = vmax.f32 %v1386, %v1434
        %v1483 = vmax.f32 %v1387, %v1435
        %v1484 = vmax.f32 %v1388, %v1436
        %v1485 = vmax.f32 %v1389, %v1437
        %v1486 = vmax.f32 %v1390, %v1438
        %v1487 = vmax.f32 %v1391, %v1439
        %v1488 = vmax.f32 %v1392, %v1440
        %v1489 = vmax.f32 %v1393, %v1441
        %vm1538 = vcmask 1046528
        %v1539 = vrot.slane %v1442, 1
        %v1540 = vrot.slane %v1443, 1
        %v1541 = vsel %vm1538, %v1539, %v1540
        %v1542 = vrot.slane %v1444, 1
        %v1543 = vsel %vm1538, %v1540, %v1542
        %v1544 = vrot.slane %v1445, 1
        %v1545 = vrot.slane %v1446, 1
        %v1546 = vsel %vm1538, %v1544, %v1545
        %v1547 = vrot.slane %v1447, 1
        %v1548 = vsel %vm1538, %v1545, %v1547
        %v1549 = vrot.slane %v1448, 1
        %v1550 = vrot.slane %v1449, 1
        %v1551 = vsel %vm1538, %v1549, %v1550
        %v1552 = vrot.slane %v1450, 1
        %v1553 = vsel %vm1538, %v1550, %v1552
        %v1554 = vrot.slane %v1451, 1
        %v1555 = vrot.slane %v1452, 1
        %v1556 = vsel %vm1538, %v1554, %v1555
        %v1557 = vrot.slane %v1453, 1
        %v1558 = vsel %vm1538, %v1555, %v1557
        %v1559 = vrot.slane %v1454, 1
        %v1560 = vrot.slane %v1455, 1
        %v1561 = vsel %vm1538, %v1559, %v1560
        %v1562 = vrot.slane %v1456, 1
        %v1563 = vsel %vm1538, %v1560, %v1562
        %v1564 = vrot.slane %v1457, 1
        %v1565 = vrot.slane %v1458, 1
        %v1566 = vsel %vm1538, %v1564, %v1565
        %v1567 = vrot.slane %v1459, 1
        %v1568 = vsel %vm1538, %v1565, %v1567
        %v1569 = vrot.slane %v1460, 1
        %v1570 = vrot.slane %v1461, 1
        %v1571 = vsel %vm1538, %v1569, %v1570
        %v1572 = vrot.slane %v1462, 1
        %v1573 = vsel %vm1538, %v1570, %v1572
        %v1574 = vrot.slane %v1463, 1
        %v1575 = vrot.slane %v1464, 1
        %v1576 = vsel %vm1538, %v1574, %v1575
        %v1577 = vrot.slane %v1465, 1
        %v1578 = vsel %vm1538, %v1575, %v1577
        %v1579 = vrot.slane %v1466, 1
        %v1580 = vrot.slane %v1467, 1
        %v1581 = vsel %vm1538, %v1579, %v1580
        %v1582 = vrot.slane %v1468, 1
        %v1583 = vsel %vm1538, %v1580, %v1582
        %v1584 = vrot.slane %v1469, 1
        %v1585 = vrot.slane %v1470, 1
        %v1586 = vsel %vm1538, %v1584, %v1585
        %v1587 = vrot.slane %v1471, 1
        %v1588 = vsel %vm1538, %v1585, %v1587
        %v1589 = vrot.slane %v1472, 1
        %v1590 = vrot.slane %v1473, 1
        %v1591 = vsel %vm1538, %v1589, %v1590
        %v1592 = vrot.slane %v1474, 1
        %v1593 = vsel %vm1538, %v1590, %v1592
        %v1594 = vrot.slane %v1475, 1
        %v1595 = vrot.slane %v1476, 1
        %v1596 = vsel %vm1538, %v1594, %v1595
        %v1597 = vrot.slane %v1477, 1
        %v1598 = vsel %vm1538, %v1595, %v1597
        %v1599 = vrot.slane %v1478, 1
        %v1600 = vrot.slane %v1479, 1
        %v1601 = vsel %vm1538, %v1599, %v1600
        %v1602 = vrot.slane %v1480, 1
        %v1603 = vsel %vm1538, %v1600, %v1602
        %v1604 = vrot.slane %v1481, 1
        %v1605 = vrot.slane %v1482, 1
        %v1606 = vsel %vm1538, %v1604, %v1605
        %v1607 = vrot.slane %v1483, 1
        %v1608 = vsel %vm1538, %v1605, %v1607
        %v1609 = vrot.slane %v1484, 1
        %v1610 = vrot.slane %v1485, 1
        %v1611 = vsel %vm1538, %v1609, %v1610
        %v1612 = vrot.slane %v1486, 1
        %v1613 = vsel %vm1538, %v1610, %v1612
        %v1614 = vrot.slane %v1487, 1
        %v1615 = vrot.slane %v1488, 1
        %v1616 = vsel %vm1538, %v1614, %v1615
        %v1617 = vrot.slane %v1489, 1
        %v1618 = vsel %vm1538, %v1615, %v1617
        %v1651 = vmax.f32 %v1442, %v1541
        %v1652 = vmax.f32 %v1443, %v1543
        %v1653 = vmax.f32 %v1445, %v1546
        %v1654 = vmax.f32 %v1446, %v1548
        %v1655 = vmax.f32 %v1448, %v1551
        %v1656 = vmax.f32 %v1449, %v1553
        %v1657 = vmax.f32 %v1451, %v1556
        %v1658 = vmax.f32 %v1452, %v1558
        %v1659 = vmax.f32 %v1454, %v1561
        %v1660 = vmax.f32 %v1455, %v1563
        %v1661 = vmax.f32 %v1457, %v1566
        %v1662 = vmax.f32 %v1458, %v1568
        %v1663 = vmax.f32 %v1460, %v1571
        %v1664 = vmax.f32 %v1461, %v1573
        %v1665 = vmax.f32 %v1463, %v1576
        %v1666 = vmax.f32 %v1464, %v1578
        %v1667 = vmax.f32 %v1466, %v1581
        %v1668 = vmax.f32 %v1467, %v1583
        %v1669 = vmax.f32 %v1469, %v1586
        %v1670 = vmax.f32 %v1470, %v1588
        %v1671 = vmax.f32 %v1472, %v1591
        %v1672 = vmax.f32 %v1473, %v1593
        %v1673 = vmax.f32 %v1475, %v1596
        %v1674 = vmax.f32 %v1476, %v1598
        %v1675 = vmax.f32 %v1478, %v1601
        %v1676 = vmax.f32 %v1479, %v1603
        %v1677 = vmax.f32 %v1481, %v1606
        %v1678 = vmax.f32 %v1482, %v1608
        %v1679 = vmax.f32 %v1484, %v1611
        %v1680 = vmax.f32 %v1485, %v1613
        %v1681 = vmax.f32 %v1487, %v1616
        %v1682 = vmax.f32 %v1488, %v1618
        %vm1683 = vcmask 1045504
        %v1684 = vrot.slane %v1442, 2
        %v1685 = vrot.slane %v1443, 2
        %v1686 = vsel %vm1683, %v1684, %v1685
        %v1687 = vrot.slane %v1444, 2
        %v1688 = vsel %vm1683, %v1685, %v1687
        %v1689 = vrot.slane %v1445, 2
        %v1690 = vrot.slane %v1446, 2
        %v1691 = vsel %vm1683, %v1689, %v1690
        %v1692 = vrot.slane %v1447, 2
        %v1693 = vsel %vm1683, %v1690, %v1692
        %v1694 = vrot.slane %v1448, 2
        %v1695 = vrot.slane %v1449, 2
        %v1696 = vsel %vm1683, %v1694, %v1695
        %v1697 = vrot.slane %v1450, 2
        %v1698 = vsel %vm1683, %v1695, %v1697
        %v1699 = vrot.slane %v1451, 2
        %v1700 = vrot.slane %v1452, 2
        %v1701 = vsel %vm1683, %v1699, %v1700
        %v1702 = vrot.slane %v1453, 2
        %v1703 = vsel %vm1683, %v1700, %v1702
        %v1704 = vrot.slane %v1454, 2
        %v1705 = vrot.slane %v1455, 2
        %v1706 = vsel %vm1683, %v1704, %v1705
        %v1707 = vrot.slane %v1456, 2
        %v1708 = vsel %vm1683, %v1705, %v1707
        %v1709 = vrot.slane %v1457, 2
        %v1710 = vrot.slane %v1458, 2
        %v1711 = vsel %vm1683, %v1709, %v1710
        %v1712 = vrot.slane %v1459, 2
        %v1713 = vsel %vm1683, %v1710, %v1712
        %v1714 = vrot.slane %v1460, 2
        %v1715 = vrot.slane %v1461, 2
        %v1716 = vsel %vm1683, %v1714, %v1715
        %v1717 = vrot.slane %v1462, 2
        %v1718 = vsel %vm1683, %v1715, %v1717
        %v1719 = vrot.slane %v1463, 2
        %v1720 = vrot.slane %v1464, 2
        %v1721 = vsel %vm1683, %v1719, %v1720
        %v1722 = vrot.slane %v1465, 2
        %v1723 = vsel %vm1683, %v1720, %v1722
        %v1724 = vrot.slane %v1466, 2
        %v1725 = vrot.slane %v1467, 2
        %v1726 = vsel %vm1683, %v1724, %v1725
        %v1727 = vrot.slane %v1468, 2
        %v1728 = vsel %vm1683, %v1725, %v1727
        %v1729 = vrot.slane %v1469, 2
        %v1730 = vrot.slane %v1470, 2
        %v1731 = vsel %vm1683, %v1729, %v1730
        %v1732 = vrot.slane %v1471, 2
        %v1733 = vsel %vm1683, %v1730, %v1732
        %v1734 = vrot.slane %v1472, 2
        %v1735 = vrot.slane %v1473, 2
        %v1736 = vsel %vm1683, %v1734, %v1735
        %v1737 = vrot.slane %v1474, 2
        %v1738 = vsel %vm1683, %v1735, %v1737
        %v1739 = vrot.slane %v1475, 2
        %v1740 = vrot.slane %v1476, 2
        %v1741 = vsel %vm1683, %v1739, %v1740
        %v1742 = vrot.slane %v1477, 2
        %v1743 = vsel %vm1683, %v1740, %v1742
        %v1744 = vrot.slane %v1478, 2
        %v1745 = vrot.slane %v1479, 2
        %v1746 = vsel %vm1683, %v1744, %v1745
        %v1747 = vrot.slane %v1480, 2
        %v1748 = vsel %vm1683, %v1745, %v1747
        %v1749 = vrot.slane %v1481, 2
        %v1750 = vrot.slane %v1482, 2
        %v1751 = vsel %vm1683, %v1749, %v1750
        %v1752 = vrot.slane %v1483, 2
        %v1753 = vsel %vm1683, %v1750, %v1752
        %v1754 = vrot.slane %v1484, 2
        %v1755 = vrot.slane %v1485, 2
        %v1756 = vsel %vm1683, %v1754, %v1755
        %v1757 = vrot.slane %v1486, 2
        %v1758 = vsel %vm1683, %v1755, %v1757
        %v1759 = vrot.slane %v1487, 2
        %v1760 = vrot.slane %v1488, 2
        %v1761 = vsel %vm1683, %v1759, %v1760
        %v1762 = vrot.slane %v1489, 2
        %v1763 = vsel %vm1683, %v1760, %v1762
        %v1796 = vmax.f32 %v1651, %v1686
        %v1797 = vmax.f32 %v1652, %v1688
        %v1798 = vmax.f32 %v1653, %v1691
        %v1799 = vmax.f32 %v1654, %v1693
        %v1800 = vmax.f32 %v1655, %v1696
        %v1801 = vmax.f32 %v1656, %v1698
        %v1802 = vmax.f32 %v1657, %v1701
        %v1803 = vmax.f32 %v1658, %v1703
        %v1804 = vmax.f32 %v1659, %v1706
        %v1805 = vmax.f32 %v1660, %v1708
        %v1806 = vmax.f32 %v1661, %v1711
        %v1807 = vmax.f32 %v1662, %v1713
        %v1808 = vmax.f32 %v1663, %v1716
        %v1809 = vmax.f32 %v1664, %v1718
        %v1810 = vmax.f32 %v1665, %v1721
        %v1811 = vmax.f32 %v1666, %v1723
        %v1812 = vmax.f32 %v1667, %v1726
        %v1813 = vmax.f32 %v1668, %v1728
        %v1814 = vmax.f32 %v1669, %v1731
        %v1815 = vmax.f32 %v1670, %v1733
        %v1816 = vmax.f32 %v1671, %v1736
        %v1817 = vmax.f32 %v1672, %v1738
        %v1818 = vmax.f32 %v1673, %v1741
        %v1819 = vmax.f32 %v1674, %v1743
        %v1820 = vmax.f32 %v1675, %v1746
        %v1821 = vmax.f32 %v1676, %v1748
        %v1822 = vmax.f32 %v1677, %v1751
        %v1823 = vmax.f32 %v1678, %v1753
        %v1824 = vmax.f32 %v1679, %v1756
        %v1825 = vmax.f32 %v1680, %v1758
        %v1826 = vmax.f32 %v1681, %v1761
        %v1827 = vmax.f32 %v1682, %v1763
        %vm1828 = vcmp.eq.f32.partialorder %v139, %v1796
        %vm1829 = vcmp.eq.f32.partialorder %v140, %v1797
        %vm1830 = vcmp.eq.f32.partialorder %v141, %v1798
        %vm1831 = vcmp.eq.f32.partialorder %v142, %v1799
        %vm1832 = vcmp.eq.f32.partialorder %v143, %v1800
        %vm1833 = vcmp.eq.f32.partialorder %v144, %v1801
        %vm1834 = vcmp.eq.f32.partialorder %v145, %v1802
        %vm1835 = vcmp.eq.f32.partialorder %v146, %v1803
        %vm1836 = vcmp.eq.f32.partialorder %v147, %v1804
        %vm1837 = vcmp.eq.f32.partialorder %v148, %v1805
        %vm1838 = vcmp.eq.f32.partialorder %v149, %v1806
        %vm1839 = vcmp.eq.f32.partialorder %v150, %v1807
        %vm1840 = vcmp.eq.f32.partialorder %v151, %v1808
        %vm1841 = vcmp.eq.f32.partialorder %v152, %v1809
        %vm1842 = vcmp.eq.f32.partialorder %v153, %v1810
        %vm1843 = vcmp.eq.f32.partialorder %v154, %v1811
        %vm1844 = vcmp.eq.f32.partialorder %v155, %v1812
        %vm1845 = vcmp.eq.f32.partialorder %v156, %v1813
        %vm1846 = vcmp.eq.f32.partialorder %v157, %v1814
        %vm1847 = vcmp.eq.f32.partialorder %v158, %v1815
        %vm1848 = vcmp.eq.f32.partialorder %v159, %v1816
        %vm1849 = vcmp.eq.f32.partialorder %v160, %v1817
        %vm1850 = vcmp.eq.f32.partialorder %v161, %v1818
        %vm1851 = vcmp.eq.f32.partialorder %v162, %v1819
        %vm1852 = vcmp.eq.f32.partialorder %v163, %v1820
        %vm1853 = vcmp.eq.f32.partialorder %v164, %v1821
        %vm1854 = vcmp.eq.f32.partialorder %v165, %v1822
        %vm1855 = vcmp.eq.f32.partialorder %v166, %v1823
        %vm1856 = vcmp.eq.f32.partialorder %v167, %v1824
        %vm1857 = vcmp.eq.f32.partialorder %v168, %v1825
        %vm1858 = vcmp.eq.f32.partialorder %v169, %v1826
        %vm1859 = vcmp.eq.f32.partialorder %v170, %v1827
        %vm1860 = vmand %vm1828, %vm1080
        %vm1861 = vmand %vm1829, %vm1081
        %vm1862 = vmand %vm1830, %vm1082
        %vm1863 = vmand %vm1831, %vm1083
        %vm1864 = vmand %vm1832, %vm1084
        %vm1865 = vmand %vm1833, %vm1085
        %vm1866 = vmand %vm1834, %vm1086
        %vm1867 = vmand %vm1835, %vm1087
        %vm1868 = vmand %vm1836, %vm1088
        %vm1869 = vmand %vm1837, %vm1089
        %vm1870 = vmand %vm1838, %vm1090
        %vm1871 = vmand %vm1839, %vm1091
        %vm1872 = vmand %vm1840, %vm1092
        %vm1873 = vmand %vm1841, %vm1093
        %vm1874 = vmand %vm1842, %vm1094
        %vm1875 = vmand %vm1843, %vm1095
        %vm1876 = vmand %vm1844, %vm1096
        %vm1877 = vmand %vm1845, %vm1097
        %vm1878 = vmand %vm1846, %vm1098
        %vm1879 = vmand %vm1847, %vm1099
        %vm1880 = vmand %vm1848, %vm1100
        %vm1881 = vmand %vm1849, %vm1101
        %vm1882 = vmand %vm1850, %vm1102
        %vm1883 = vmand %vm1851, %vm1103
        %vm1884 = vmand %vm1852, %vm1104
        %vm1885 = vmand %vm1853, %vm1105
        %vm1886 = vmand %vm1854, %vm1106
        %vm1887 = vmand %vm1855, %vm1107
        %vm1888 = vmand %vm1856, %vm1108
        %vm1889 = vmand %vm1857, %vm1109
        %vm1890 = vmand %vm1858, %vm1110
        %vm1891 = vmand %vm1859, %vm1111
        %vm1892 = vmand %vm1176, %vm1860
        %vm1893 = vmand %vm1177, %vm1861
        %vm1894 = vmand %vm1178, %vm1862
        %vm1895 = vmand %vm1179, %vm1863
        %vm1896 = vmand %vm1180, %vm1864
        %vm1897 = vmand %vm1181, %vm1865
        %vm1898 = vmand %vm1182, %vm1866
        %vm1899 = vmand %vm1183, %vm1867
        %vm1900 = vmand %vm1184, %vm1868
        %vm1901 = vmand %vm1185, %vm1869
        %vm1902 = vmand %vm1186, %vm1870
        %vm1903 = vmand %vm1187, %vm1871
        %vm1904 = vmand %vm1188, %vm1872
        %vm1905 = vmand %vm1189, %vm1873
        %vm1906 = vmand %vm1190, %vm1874
        %vm1907 = vmand %vm1191, %vm1875
        %vm1908 = vmand %vm1192, %vm1876
        %vm1909 = vmand %vm1193, %vm1877
        %vm1910 = vmand %vm1194, %vm1878
        %vm1911 = vmand %vm1195, %vm1879
        %vm1912 = vmand %vm1196, %vm1880
        %vm1913 = vmand %vm1197, %vm1881
        %vm1914 = vmand %vm1198, %vm1882
        %vm1915 = vmand %vm1199, %vm1883
        %vm1916 = vmand %vm1200, %vm1884
        %vm1917 = vmand %vm1201, %vm1885
        %vm1918 = vmand %vm1202, %vm1886
        %vm1919 = vmand %vm1203, %vm1887
        %vm1920 = vmand %vm1204, %vm1888
        %vm1921 = vmand %vm1205, %vm1889
        %vm1922 = vmand %vm1206, %vm1890
        %vm1923 = vmand %vm1207, %vm1891
        %vm1924 = vmpackc.low %vm1893, %vm1892
        %vm1925 = vmpackc.low %vm1895, %vm1894
        %vm1926 = vmpackc.even %vm1925, %vm1924
        %vm1927 = vmpackc.low %vm1897, %vm1896
        %vm1928 = vmpackc.low %vm1899, %vm1898
        %vm1929 = vmpackc.even %vm1928, %vm1927
        %vm1930 = vmpackc.low %vm1901, %vm1900
        %vm1931 = vmpackc.low %vm1903, %vm1902
        %vm1932 = vmpackc.even %vm1931, %vm1930
        %vm1933 = vmpackc.low %vm1905, %vm1904
        %vm1934 = vmpackc.low %vm1907, %vm1906
        %vm1935 = vmpackc.even %vm1934, %vm1933
        %vm1936 = vmpackc.low %vm1909, %vm1908
        %vm1937 = vmpackc.low %vm1911, %vm1910
        %vm1938 = vmpackc.even %vm1937, %vm1936
        %vm1939 = vmpackc.low %vm1913, %vm1912
        %vm1940 = vmpackc.low %vm1915, %vm1914
        %vm1941 = vmpackc.even %vm1940, %vm1939
        %vm1942 = vmpackc.low %vm1917, %vm1916
        %vm1943 = vmpackc.low %vm1919, %vm1918
        %vm1944 = vmpackc.even %vm1943, %vm1942
        %vm1945 = vmpackc.low %vm1921, %vm1920
        %vm1946 = vmpackc.low %vm1923, %vm1922
        %vm1947 = vmpackc.even %vm1946, %vm1945
        %v1948 = vsel %vm1926, 16843009, 0
        %v1949 = vsel %vm1929, 16843009, 0
        %v1950 = vsel %vm1932, 16843009, 0
        %v1951 = vsel %vm1935, 16843009, 0
        %v1952 = vsel %vm1938, 16843009, 0
        %v1953 = vsel %vm1941, 16843009, 0
        %v1954 = vsel %vm1944, 16843009, 0
        %v1955 = vsel %vm1947, 16843009, 0
        %v1956 = vunpack.c.0.s8 %v1948
        %v1957 = vunpack.c.1.s8 %v1948
        %v1958 = vunpack.c.2.s8 %v1948
        %v1959 = vunpack.c.3.s8 %v1948
        %v1960 = vunpack.c.0.s8 %v1949
        %v1961 = vunpack.c.1.s8 %v1949
        %v1962 = vunpack.c.2.s8 %v1949
        %v1963 = vunpack.c.3.s8 %v1949
        %v1964 = vunpack.c.0.s8 %v1950
        %v1965 = vunpack.c.1.s8 %v1950
        %v1966 = vunpack.c.2.s8 %v1950
        %v1967 = vunpack.c.3.s8 %v1950
        %v1968 = vunpack.c.0.s8 %v1951
        %v1969 = vunpack.c.1.s8 %v1951
        %v1970 = vunpack.c.2.s8 %v1951
        %v1971 = vunpack.c.3.s8 %v1951
        %v1972 = vunpack.c.0.s8 %v1952
        %v1973 = vunpack.c.1.s8 %v1952
        %v1974 = vunpack.c.2.s8 %v1952
        %v1975 = vunpack.c.3.s8 %v1952
        %v1976 = vunpack.c.0.s8 %v1953
        %v1977 = vunpack.c.1.s8 %v1953
        %v1978 = vunpack.c.2.s8 %v1953
        %v1979 = vunpack.c.3.s8 %v1953
        %v1980 = vunpack.c.0.s8 %v1954
        %v1981 = vunpack.c.1.s8 %v1954
        %v1982 = vunpack.c.2.s8 %v1954
        %v1983 = vunpack.c.3.s8 %v1954
        %v1984 = vunpack.c.0.s8 %v1955
        %v1985 = vunpack.c.1.s8 %v1955
        %v1986 = vunpack.c.2.s8 %v1955
        %v1987 = vunpack.c.3.s8 %v1955
        %v1988 = vpack.c.b16 %v1956, %v1956
        %v1989 = vpack.c.b8 %v1988, %v1988
        %v1990 = vpack.c.b16 %v1957, %v1957
        %v1991 = vpack.c.b8 %v1990, %v1990
        %v1992 = vpack.c.b16 %v1958, %v1958
        %v1993 = vpack.c.b8 %v1992, %v1992
        %v1994 = vpack.c.b16 %v1959, %v1959
        %v1995 = vpack.c.b8 %v1994, %v1994
        %v1996 = vpack.c.b16 %v1960, %v1960
        %v1997 = vpack.c.b8 %v1996, %v1996
        %v1998 = vpack.c.b16 %v1961, %v1961
        %v1999 = vpack.c.b8 %v1998, %v1998
        %v2000 = vpack.c.b16 %v1962, %v1962
        %v2001 = vpack.c.b8 %v2000, %v2000
        %v2002 = vpack.c.b16 %v1963, %v1963
        %v2003 = vpack.c.b8 %v2002, %v2002
        %v2004 = vpack.c.b16 %v1964, %v1964
        %v2005 = vpack.c.b8 %v2004, %v2004
        %v2006 = vpack.c.b16 %v1965, %v1965
        %v2007 = vpack.c.b8 %v2006, %v2006
        %v2008 = vpack.c.b16 %v1966, %v1966
        %v2009 = vpack.c.b8 %v2008, %v2008
        %v2010 = vpack.c.b16 %v1967, %v1967
        %v2011 = vpack.c.b8 %v2010, %v2010
        %v2012 = vpack.c.b16 %v1968, %v1968
        %v2013 = vpack.c.b8 %v2012, %v2012
        %v2014 = vpack.c.b16 %v1969, %v1969
        %v2015 = vpack.c.b8 %v2014, %v2014
        %v2016 = vpack.c.b16 %v1970, %v1970
        %v2017 = vpack.c.b8 %v2016, %v2016
        %v2018 = vpack.c.b16 %v1971, %v1971
        %v2019 = vpack.c.b8 %v2018, %v2018
        %v2020 = vpack.c.b16 %v1972, %v1972
        %v2021 = vpack.c.b8 %v2020, %v2020
        %v2022 = vpack.c.b16 %v1973, %v1973
        %v2023 = vpack.c.b8 %v2022, %v2022
        %v2024 = vpack.c.b16 %v1974, %v1974
        %v2025 = vpack.c.b8 %v2024, %v2024
        %v2026 = vpack.c.b16 %v1975, %v1975
        %v2027 = vpack.c.b8 %v2026, %v2026
        %v2028 = vpack.c.b16 %v1976, %v1976
        %v2029 = vpack.c.b8 %v2028, %v2028
        %v2030 = vpack.c.b16 %v1977, %v1977
        %v2031 = vpack.c.b8 %v2030, %v2030
        %v2032 = vpack.c.b16 %v1978, %v1978
        %v2033 = vpack.c.b8 %v2032, %v2032
        %v2034 = vpack.c.b16 %v1979, %v1979
        %v2035 = vpack.c.b8 %v2034, %v2034
        %v2036 = vpack.c.b16 %v1980, %v1980
        %v2037 = vpack.c.b8 %v2036, %v2036
        %v2038 = vpack.c.b16 %v1981, %v1981
        %v2039 = vpack.c.b8 %v2038, %v2038
        %v2040 = vpack.c.b16 %v1982, %v1982
        %v2041 = vpack.c.b8 %v2040, %v2040
        %v2042 = vpack.c.b16 %v1983, %v1983
        %v2043 = vpack.c.b8 %v2042, %v2042
        %v2044 = vpack.c.b16 %v1984, %v1984
        %v2045 = vpack.c.b8 %v2044, %v2044
        %v2046 = vpack.c.b16 %v1985, %v1985
        %v2047 = vpack.c.b8 %v2046, %v2046
        %v2048 = vpack.c.b16 %v1986, %v1986
        %v2049 = vpack.c.b8 %v2048, %v2048
        %v2050 = vpack.c.b16 %v1987, %v1987
        %v2051 = vpack.c.b8 %v2050, %v2050
        %2052 = vst [vmem:[%s136] sm:$0x3] %v1989
        %2053 = vst [vmem:[%s136 + $0x2] sm:$0x3] %v1991
        %2054 = vst [vmem:[%s136 + $0x4] sm:$0x3] %v1993
        %2055 = vst [vmem:[%s136 + $0x6] sm:$0x3] %v1995
        %2056 = vst [vmem:[%s136 + $0x8] sm:$0x3] %v1997
        %2057 = vst [vmem:[%s136 + $0xa] sm:$0x3] %v1999
        %2058 = vst [vmem:[%s136 + $0xc] sm:$0x3] %v2001
        %2059 = vst [vmem:[%s136 + $0xe] sm:$0x3] %v2003
        %2060 = vst [vmem:[%s136 + $0x10] sm:$0x3] %v2005
        %2061 = vst [vmem:[%s136 + $0x12] sm:$0x3] %v2007
        %2062 = vst [vmem:[%s136 + $0x14] sm:$0x3] %v2009
        %2063 = vst [vmem:[%s136 + $0x16] sm:$0x3] %v2011
        %2064 = vst [vmem:[%s136 + $0x18] sm:$0x3] %v2013
        %2065 = vst [vmem:[%s136 + $0x1a] sm:$0x3] %v2015
        %2066 = vst [vmem:[%s136 + $0x1c] sm:$0x3] %v2017
        %2067 = vst [vmem:[%s136 + $0x1e] sm:$0x3] %v2019
        %2068 = vst [vmem:[%s136 + $0x20] sm:$0x3] %v2021
        %2069 = vst [vmem:[%s136 + $0x22] sm:$0x3] %v2023
        %2070 = vst [vmem:[%s136 + $0x24] sm:$0x3] %v2025
        %2071 = vst [vmem:[%s136 + $0x26] sm:$0x3] %v2027
        %2072 = vst [vmem:[%s136 + $0x28] sm:$0x3] %v2029
        %2073 = vst [vmem:[%s136 + $0x2a] sm:$0x3] %v2031
        %2074 = vst [vmem:[%s136 + $0x2c] sm:$0x3] %v2033
        %2075 = vst [vmem:[%s136 + $0x2e] sm:$0x3] %v2035
        %2076 = vst [vmem:[%s136 + $0x30] sm:$0x3] %v2037
        %2077 = vst [vmem:[%s136 + $0x32] sm:$0x3] %v2039
        %2078 = vst [vmem:[%s136 + $0x34] sm:$0x3] %v2041
        %2079 = vst [vmem:[%s136 + $0x36] sm:$0x3] %v2043
        %2080 = vst [vmem:[%s136 + $0x38] sm:$0x3] %v2045
        %2081 = vst [vmem:[%s136 + $0x3a] sm:$0x3] %v2047
        %2082 = vst [vmem:[%s136 + $0x3c] sm:$0x3] %v2049
        %2083 = vst [vmem:[%s136 + $0x3e] sm:$0x3] %v2051
        %p2084 = scmp.lt.s32.totalorder %s15, 1
        %s2085 = scalar_select %p2084, %s15, 1
        %s2086 = smul.addr %s2085, 32
        %s2087 = smul.addr %s2086, 2
        %s2088 = scalar_lea.vmem %s1, %s2087
        // Predicated region
        $region29: #{hard_detection_module.1} parent=23 // pred_check
          %p2089 = pneg %p59
        $region30: #{hard_detection_module.1} parent=23 // pred_check_branch
          %2091 = sbr.rel (%p2089) target = $region32
        $region31: #{hard_detection_module.1} parent=23 // pred_region
          _
        $region32: #{hard_detection_module.1} parent=23 // pred_fallthru
          _
      $region24: #{hard_detection_module.1} parent=5 // pred_fallthru
        _
      %p2092 = scmp.le.s32.totalorder 2, %s10
      // Predicated region
      $region33: #{hard_detection_module.1} parent=5 // pred_check
        %p2093 = pneg %p2092
      $region34: #{hard_detection_module.1} parent=5 // pred_check_branch
        %2095 = sbr.rel (%p2093) target = $region36
      $region35: #{hard_detection_module.1} parent=5 // pred_region
        %s2096 = ssub.s32 %s10, 2
        // Predicated region
        $region37: #{hard_detection_module.1} parent=35 // pred_check
          %p2097 = pneg %p65
        $region38: #{hard_detection_module.1} parent=35 // pred_check_branch
          %2099 = sbr.rel (%p2097) target = $region40
        $region39: #{hard_detection_module.1} parent=35 // pred_region
          %p2100 = scmp.lt.s32.totalorder %s16, 1
          %s2101 = scalar_select %p2100, %s16, 1
          %s2102 = smul.addr %s2101, 32
          %s2103 = smul.addr %s2102, 2
          %s2104 = scalar_lea.vmem %s1, %s2103
        $region40: #{hard_detection_module.1} parent=35 // pred_fallthru
          _
      $region36: #{hard_detection_module.1} parent=5 // pred_fallthru
        _
    $region6: #{hard_detection_module.1} parent=1 // loop_footer
      %s14 = sadd.s32 1, %s10
    $region7: #{hard_detection_module.1} parent=1 // loop_footer_branch
      %9 = sbr.rel target = $region3
    $region8: #{hard_detection_module.1} parent=1 // loop_exit
      _
    %2105 = vsyncpa [#allocation4], 1
    %s2106 = scalar_lea.sflag [#allocation4], 1
    %2107 = vsyncpa %s2106, 1

</llo_original>
